<compile_context>
chip_gen: v7x
topology: tpu7x:2x2x1
jax: 0.10.0
libtpu: 0.0.40
codegen_flags: <defaults>
</compile_context>

<pallas_src>
import functools

import jax
import jax.numpy as jnp
from jax.experimental import pallas as pl
from jax.experimental.pallas import tpu as pltpu


def _round_up(v, m):
    return (v + m - 1) // m * m


def _pick_chunk(S, target=64):
    """Largest divisor of S that is <= target (keeps blocks exact, no seq padding)."""
    ts = min(S, target)
    while S % ts != 0:
        ts -= 1
    return max(ts, 1)


# ----------------------------------------------------------------------------
# One GRU layer: grid over sequence chunks, h carried in VMEM scratch.
# ----------------------------------------------------------------------------
def _gru_kernel(collect_seq, fuse_fc, x_ref, wi_ref, wh_ref, bin_ref, bhn_ref,
                *refs):
    idx = 0
    if fuse_fc:
        fcw_ref, fcb_ref = refs[idx], refs[idx + 1]
        idx += 2
    if collect_seq:
        hseq_ref = refs[idx]
        idx += 1
    else:
        hseq_ref = None
    out_ref = refs[idx]
    gin_ref = refs[idx + 1]
    h_carry = refs[idx + 2]

    Ts, Bp, Ip = x_ref.shape
    Hp = wh_ref.shape[0]
    G = 3 * Hp
    s = pl.program_id(0)

    @pl.when(s == 0)
    def _():
        h_carry[...] = jnp.zeros_like(h_carry)

    # Hoisted input projection for this chunk: one (Ts*Bp, Ip) x (Ip, 3Hp) MXU matmul.
    # bin_ref already holds [b_ir+b_hr | b_iz+b_hz | b_in] (padded).
    x2d = x_ref[...].reshape(Ts * Bp, Ip)
    gin = jnp.dot(x2d, wi_ref[...], preferred_element_type=jnp.float32) + bin_ref[...]
    gin_ref[...] = gin.reshape(Ts, Bp, G)

    # Invariant reads / broadcasts hoisted out of the time loop.
    wh = wh_ref[...]
    bhn = jnp.broadcast_to(bhn_ref[...], (Bp, Hp))

    def step(t, h):
        g_in = gin_ref[t]                                         # (Bp, 3Hp)
        g_h = jnp.dot(h, wh, preferred_element_type=jnp.float32)  # (Bp, 3Hp)
        # One sigmoid over the contiguous r|z slab (fewer EUP pushes on the serial path).
        rz = jax.nn.sigmoid(g_in[:, 0:2 * Hp] + g_h[:, 0:2 * Hp])
        r = rz[:, 0:Hp]
        z = rz[:, Hp:2 * Hp]
        n = jnp.tanh(g_in[:, 2 * Hp:G] + r * (g_h[:, 2 * Hp:G] + bhn))
        h_new = (1.0 - z) * n + z * h
        if hseq_ref is not None:
            hseq_ref[t] = h_new
        return h_new

    h = jax.lax.fori_loop(0, Ts, step, h_carry[...], unroll=min(Ts, 8))
    h_carry[...] = h

    @pl.when(s == pl.num_programs(0) - 1)
    def _():
        if fuse_fc:
            out_ref[...] = (jnp.dot(h, fcw_ref[...],
                                    preferred_element_type=jnp.float32)
                            + fcb_ref[...])
        else:
            out_ref[...] = h


def gru_layer(x_padded, wi, wh, b_in, b_hn, *, collect_seq,
              fc_w=None, fc_b=None, seq_chunk=64):
    """One GRU layer on padded, fused weights.

    x_padded: (S, Bp, Ip); wi: (Ip, 3Hp); wh: (Hp, 3Hp);
    b_in: (1, 3Hp); b_hn: (1, Hp).  Optional fused fc (fc_w: (Hp, Op), fc_b: (1, Op)).
    Returns (h_seq or None, h_final_or_fc_out) with padded shapes.
    """
    S, Bp, Ip = x_padded.shape
    Hp = wh.shape[0]
    fuse_fc = fc_w is not None
    Op = fc_w.shape[1] if fuse_fc else Hp
    Ts = _pick_chunk(S, seq_chunk)
    n_chunks = S // Ts

    const = lambda shape: pl.BlockSpec(shape, lambda s: (0,) * len(shape))

    in_specs = [
        pl.BlockSpec((Ts, Bp, Ip), lambda s: (s, 0, 0)),   # x chunk (double-buffered)
        const((Ip, 3 * Hp)),                               # fused input weights
        const((Hp, 3 * Hp)),                               # fused hidden weights
        const((1, 3 * Hp)),                                # fused input-path bias
        const((1, Hp)),                                    # b_hn (hidden path, n slice)
    ]
    inputs = [x_padded, wi, wh, b_in, b_hn]
    if fuse_fc:
        in_specs += [const((Hp, Op)), const((1, Op))]
        inputs += [fc_w, fc_b]

    out_shape, out_specs = [], []
    if collect_seq:
        out_shape.append(jax.ShapeDtypeStruct((S, Bp, Hp), jnp.float32))
        out_specs.append(pl.BlockSpec((Ts, Bp, Hp), lambda s: (s, 0, 0)))
    out_shape.append(jax.ShapeDtypeStruct((Bp, Op), jnp.float32))
    out_specs.append(const((Bp, Op)))

    # VMEM budget sized from the actual buffers (double-buffered chunk I/O), capped
    # at 64 MiB (v7x physical VMEM).
    elems = (2 * Ts * Bp * Ip                 # x chunk x2
             + Ip * 3 * Hp + Hp * 3 * Hp      # weights
             + 4 * Hp                         # biases
             + Ts * Bp * 3 * Hp               # gin scratch
             + Bp * Hp                        # h carry
             + Bp * Op)                       # final output
    if fuse_fc:
        elems += Hp * Op + Op
    if collect_seq:
        elems += 2 * Ts * Bp * Hp             # h_seq chunk x2
    vmem_limit = min(int(elems * 4 * 1.25) + (8 << 20), 64 * 1024 * 1024)

    flops = 2 * S * Bp * Ip * 3 * Hp + 2 * S * Bp * Hp * 3 * Hp
    if fuse_fc:
        flops += 2 * Bp * Hp * Op
    bytes_accessed = 4 * (S * Bp * Ip + Ip * 3 * Hp + Hp * 3 * Hp
                          + (S * Bp * Hp if collect_seq else 0) + Bp * Op)
    cost = pl.CostEstimate(flops=flops,
                           transcendentals=3 * S * Bp * Hp,
                           bytes_accessed=bytes_accessed)

    outs = pl.pallas_call(
        functools.partial(_gru_kernel, collect_seq, fuse_fc),
        out_shape=tuple(out_shape),
        grid_spec=pltpu.PrefetchScalarGridSpec(
            num_scalar_prefetch=0,
            grid=(n_chunks,),
            in_specs=in_specs,
            out_specs=tuple(out_specs),
            scratch_shapes=[pltpu.VMEM((Ts, Bp, 3 * Hp), jnp.float32),  # gin chunk
                            pltpu.VMEM((Bp, Hp), jnp.float32)]),        # carried h
        compiler_params=pltpu.CompilerParams(
            dimension_semantics=("arbitrary",),
            vmem_limit_bytes=vmem_limit),
        cost_estimate=cost,
    )(*inputs)

    if collect_seq:
        return outs[0], outs[1]
    return None, outs[0]


# ----------------------------------------------------------------------------
# fc: Linear(hidden_size, output_size) — only used on the multi-layer path.
# ----------------------------------------------------------------------------
def _fc_kernel(h_ref, w_ref, b_ref, o_ref):
    o_ref[...] = (jnp.dot(h_ref[...], w_ref[...],
                          preferred_element_type=jnp.float32)
                  + b_ref[...])


def fc_pallas(h, w, b):
    """h: (Np, Hp); w: (Hp, Op); b: (1, Op) -> (Np, Op)."""
    Np, Hp = h.shape
    Op = w.shape[1]
    vmem = lambda: pl.BlockSpec(memory_space=pltpu.MemorySpace.VMEM)
    vmem_limit = min(4 * 2 * (Np * Hp + Hp * Op + Op + Np * Op) + (4 << 20),
                     64 * 1024 * 1024)
    return pl.pallas_call(
        _fc_kernel,
        out_shape=jax.ShapeDtypeStruct((Np, Op), jnp.float32),
        in_specs=[vmem(), vmem(), vmem()],
        out_specs=vmem(),
        compiler_params=pltpu.CompilerParams(vmem_limit_bytes=vmem_limit),
    )(h, w, b)


# ----------------------------------------------------------------------------
# One-time weight prep (hoisted out of the jitted forward).
# ----------------------------------------------------------------------------
def _prep_gru_layer(w_ih, w_hh, b_ih, b_hh, in_pad, Hp):
    H = w_hh.shape[1]

    def pad2(m, rows, cols):
        return jnp.pad(m, ((0, rows - m.shape[0]), (0, cols - m.shape[1])))

    # Fused input weights (in_pad, 3Hp): [W_ir^T | W_iz^T | W_in^T], each zero-padded.
    wi = jnp.concatenate(
        [pad2(w_ih[g * H:(g + 1) * H].T, in_pad, Hp) for g in range(3)], axis=1)
    # Fused hidden weights (Hp, 3Hp): [W_hr^T | W_hz^T | W_hn^T].
    wh = jnp.concatenate(
        [pad2(w_hh[g * H:(g + 1) * H].T, Hp, Hp) for g in range(3)], axis=1)

    padv = lambda v: jnp.pad(v, (0, Hp - H))
    # Input-path fused bias: r/z get b_ih+b_hh; n gets b_in only (b_hn is r-gated).
    b_in = jnp.concatenate([
        padv(b_ih[0:H] + b_hh[0:H]),
        padv(b_ih[H:2 * H] + b_hh[H:2 * H]),
        padv(b_ih[2 * H:3 * H]),
    ]).reshape(1, 3 * Hp)
    # Hidden-path bias: only b_hn (added inside the r gate).
    b_hn = padv(b_hh[2 * H:3 * H]).reshape(1, Hp)
    return wi, wh, b_in, b_hn


def prepare_params(params, input_size):
    """Run ONCE: transpose/pad/fuse weights and fold biases; cached across calls."""
    layers = params["gru_layers"]
    H = layers[0][1].shape[1]
    O = params["fc_w"].shape[1]
    Ip = _round_up(input_size, 128)
    Hp = _round_up(H, 128)
    Op = _round_up(O, 128)

    prepped = []
    for li, (w_ih, w_hh, b_ih, b_hh) in enumerate(layers):
        in_pad = Ip if li == 0 else Hp
        prepped.append(_prep_gru_layer(w_ih, w_hh, b_ih, b_hh, in_pad, Hp))

    fc_wp = jnp.pad(params["fc_w"], ((0, Hp - H), (0, Op - O)))
    fc_bp = jnp.pad(params["fc_b"].reshape(1, O), ((0, 0), (0, Op - O)))
    return {"layers": tuple(prepped), "fc_w": fc_wp, "fc_b": fc_bp}


# ----------------------------------------------------------------------------
# Full model forward: _, hidden = gru(x); out = fc(hidden.squeeze(0))
# ----------------------------------------------------------------------------
@functools.partial(jax.jit, static_argnames=("hidden_size", "output_size"))
def gru_model_forward(x, prepped, hidden_size, output_size):
    layers = prepped["layers"]
    fc_w, fc_b = prepped["fc_w"], prepped["fc_b"]
    num_layers = len(layers)

    S, B, I = x.shape
    H, O = hidden_size, output_size
    Bp = _round_up(B, 8)       # sublanes
    Ip = _round_up(I, 128)     # lanes
    Hp = _round_up(H, 128)     # lanes
    Op = _round_up(O, 128)     # lanes

    # Zero-pad x; padded hidden columns stay exactly zero through the recurrence.
    inp = jnp.pad(x, ((0, 0), (0, Bp - B), (0, Ip - I)))

    if num_layers == 1:
        # torch .squeeze(0) drops dim 0 -> fc(h_final); fuse fc into the GRU kernel.
        wi, wh, b_in, b_hn = layers[0]
        _, out_p = gru_layer(inp, wi, wh, b_in, b_hn, collect_seq=False,
                             fc_w=fc_w, fc_b=fc_b)
        return out_p[:B, :O]

    finals = []
    for li, (wi, wh, b_in, b_hn) in enumerate(layers):
        collect = li < num_layers - 1          # last layer: never-read h_seq skipped
        h_seq, h_final = gru_layer(inp, wi, wh, b_in, b_hn, collect_seq=collect)
        finals.append(h_final)
        if collect:
            inp = h_seq

    hidden_p = jnp.stack(finals, axis=0)       # (L, Bp, Hp)
    # torch .squeeze(0) keeps dim 0 when num_layers > 1 -> fc over (L*Bp, Hp).
    flat = hidden_p.reshape(num_layers * Bp, Hp)
    out_p = fc_pallas(flat, fc_w, fc_b).reshape(num_layers, Bp, Op)
    return out_p[:, :B, :O]


def init_params(key, input_size, hidden_size, output_size):
    num_layers = output_size  # nn.GRU(input_size, hidden_size, output_size) quirk
    k = 1.0 / jnp.sqrt(jnp.float32(hidden_size))
    layers = []
    for layer in range(num_layers):
        in_sz = input_size if layer == 0 else hidden_size
        key, k1, k2, k3, k4 = jax.random.split(key, 5)
        w_ih = jax.random.uniform(k1, (3 * hidden_size, in_sz), jnp.float32, -k, k)
        w_hh = jax.random.uniform(k2, (3 * hidden_size, hidden_size), jnp.float32, -k, k)
        b_ih = jax.random.uniform(k3, (3 * hidden_size,), jnp.float32, -k, k)
        b_hh = jax.random.uniform(k4, (3 * hidden_size,), jnp.float32, -k, k)
        layers.append((w_ih, w_hh, b_ih, b_hh))
    key, k5, k6 = jax.random.split(key, 3)
    kf = 1.0 / jnp.sqrt(jnp.float32(hidden_size))
    fc_w = jax.random.uniform(k5, (hidden_size, output_size), jnp.float32, -kf, kf)
    fc_b = jax.random.uniform(k6, (output_size,), jnp.float32, -kf, kf)
    return {"gru_layers": layers, "fc_w": fc_w, "fc_b": fc_b}


if __name__ == "__main__":
    SEQ, BATCH, INPUT, HIDDEN, OUTPUT = 8, 2, 16, 32, 1

    key = jax.random.PRNGKey(0)
    key, kx = jax.random.split(key)
    # layout: (seq_len, batch, input_size) — PyTorch nn.GRU default batch_first=False
    x = jax.random.normal(kx, (SEQ, BATCH, INPUT), jnp.float32)

    params = init_params(key, INPUT, HIDDEN, OUTPUT)
    prepped = prepare_params(params, INPUT)   # one-time weight prep (not per forward)

    out = gru_model_forward(x, prepped, HIDDEN, OUTPUT)
    out = jax.block_until_ready(out)
    assert out.shape == (BATCH, OUTPUT), out.shape
    assert bool(jnp.all(jnp.isfinite(out)))
    print("KERNEL_OK")
</pallas_src>

<mosaic_0001>
module attributes {stable_mosaic.version = 11 : i64} {
  func.func @_gru_kernel(%arg0: i32, %arg1: memref<8x8x128xf32, #tpu.memory_space<vmem>>, %arg2: memref<128x384xf32, #tpu.memory_space<vmem>>, %arg3: memref<128x384xf32, #tpu.memory_space<vmem>>, %arg4: memref<1x384xf32, #tpu.memory_space<vmem>>, %arg5: memref<1x128xf32, #tpu.memory_space<vmem>>, %arg6: memref<128x128xf32, #tpu.memory_space<vmem>>, %arg7: memref<1x128xf32, #tpu.memory_space<vmem>>, %arg8: memref<8x128xf32, #tpu.memory_space<vmem>>, %arg9: memref<8x8x384xf32, #tpu.memory_space<vmem>>, %arg10: memref<8x128xf32, #tpu.memory_space<vmem>>) attributes {dimension_semantics = [#tpu.dimension_semantics<arbitrary>], iteration_bounds = array<i64: 1>, scalar_prefetch = 0 : i64, scratch_operands = 2 : i64, tpu.core_type = #tpu.core_type<tc>, window_params = [{transform_indices = @transform_0, window_bounds = array<i64: 8, 8, 128>}, {pipeline_mode = #tpu.pipeline_mode<synchronous>, transform_indices = @transform_1, window_bounds = array<i64: 128, 384>}, {pipeline_mode = #tpu.pipeline_mode<synchronous>, transform_indices = @transform_2, window_bounds = array<i64: 128, 384>}, {pipeline_mode = #tpu.pipeline_mode<synchronous>, transform_indices = @transform_3, window_bounds = array<i64: 1, 384>}, {pipeline_mode = #tpu.pipeline_mode<synchronous>, transform_indices = @transform_4, window_bounds = array<i64: 1, 128>}, {pipeline_mode = #tpu.pipeline_mode<synchronous>, transform_indices = @transform_5, window_bounds = array<i64: 128, 128>}, {pipeline_mode = #tpu.pipeline_mode<synchronous>, transform_indices = @transform_6, window_bounds = array<i64: 1, 128>}, {pipeline_mode = #tpu.pipeline_mode<synchronous>, transform_indices = @transform_7, window_bounds = array<i64: 8, 128>}]} {
    %c0_i32 = arith.constant 0 : i32
    %0 = arith.cmpi eq, %arg0, %c0_i32 : i32
    %1 = arith.extui %0 : i1 to i32
    %c0_i32_0 = arith.constant 0 : i32
    %2 = arith.cmpi ne, %1, %c0_i32_0 : i32
    scf.if %2 {
      %cst_61 = arith.constant 0.000000e+00 : f32
      %221 = vector.broadcast %cst_61 : f32 to vector<8x128xf32>
      %c0_62 = arith.constant 0 : index
      %c0_63 = arith.constant 0 : index
      %222 = vector.load %arg10[%c0_62, %c0_63] : memref<8x128xf32, #tpu.memory_space<vmem>>, vector<8x128xf32>
      tpu.vector_store %arg10[%c0_62, %c0_63], %221 {strides = array<i32>} : memref<8x128xf32, #tpu.memory_space<vmem>>, vector<8x128xf32>,
    } else {
    }
    %c0 = arith.constant 0 : index
    %c0_1 = arith.constant 0 : index
    %c0_2 = arith.constant 0 : index
    %3 = vector.load %arg1[%c0, %c0_1, %c0_2] : memref<8x8x128xf32, #tpu.memory_space<vmem>>, vector<8x8x128xf32>
    %4 = vector.shape_cast %3 : vector<8x8x128xf32> to vector<64x128xf32>
    %c0_3 = arith.constant 0 : index
    %c0_4 = arith.constant 0 : index
    %5 = vector.load %arg2[%c0_3, %c0_4] : memref<128x384xf32, #tpu.memory_space<vmem>>, vector<128x384xf32>
    %cst = arith.constant dense<0.000000e+00> : vector<64x384xf32>
    %6 = tpu.matmul %4, %5, %cst {dimension_numbers = #tpu.dot_dimension_numbers<[1], [0], [0], [1], [0, 0, 1, 1], [], []>} : vector<64x128xf32>, vector<128x384xf32>, vector<64x384xf32> -> vector<64x384xf32>
    %c0_5 = arith.constant 0 : index
    %c0_6 = arith.constant 0 : index
    %7 = vector.load %arg4[%c0_5, %c0_6] : memref<1x384xf32, #tpu.memory_space<vmem>>, vector<1x384xf32>
    %8 = vector.broadcast %7 : vector<1x384xf32> to vector<64x384xf32>
    %9 = arith.addf %6, %8 : vector<64x384xf32>
    %10 = vector.shape_cast %9 : vector<64x384xf32> to vector<8x8x384xf32>
    %c0_7 = arith.constant 0 : index
    %c0_8 = arith.constant 0 : index
    %c0_9 = arith.constant 0 : index
    %11 = vector.load %arg9[%c0_7, %c0_8, %c0_9] : memref<8x8x384xf32, #tpu.memory_space<vmem>>, vector<8x8x384xf32>
    tpu.vector_store %arg9[%c0_7, %c0_8, %c0_9], %10 {strides = array<i32>} : memref<8x8x384xf32, #tpu.memory_space<vmem>>, vector<8x8x384xf32>,
    %c0_10 = arith.constant 0 : index
    %c0_11 = arith.constant 0 : index
    %12 = vector.load %arg3[%c0_10, %c0_11] : memref<128x384xf32, #tpu.memory_space<vmem>>, vector<128x384xf32>
    %c0_12 = arith.constant 0 : index
    %c0_13 = arith.constant 0 : index
    %13 = vector.load %arg5[%c0_12, %c0_13] : memref<1x128xf32, #tpu.memory_space<vmem>>, vector<1x128xf32>
    %14 = vector.shape_cast %13 : vector<1x128xf32> to vector<1x128xf32>
    %15 = vector.broadcast %14 : vector<1x128xf32> to vector<8x128xf32>
    %c0_14 = arith.constant 0 : index
    %c0_15 = arith.constant 0 : index
    %16 = vector.load %arg10[%c0_14, %c0_15] : memref<8x128xf32, #tpu.memory_space<vmem>>, vector<8x128xf32>
    %c0_i32_16 = arith.constant 0 : i32
    %17 = arith.index_cast %c0_i32_16 : i32 to index
    %c0_17 = arith.constant 0 : index
    %c0_18 = arith.constant 0 : index
    %18 = vector.load %arg9[%17, %c0_17, %c0_18] : memref<8x8x384xf32, #tpu.memory_space<vmem>>, vector<1x8x384xf32>
    %19 = vector.shape_cast %18 : vector<1x8x384xf32> to vector<8x384xf32>
    %cst_19 = arith.constant dense<0.000000e+00> : vector<8x384xf32>
    %20 = tpu.matmul %16, %12, %cst_19 {dimension_numbers = #tpu.dot_dimension_numbers<[1], [0], [0], [1], [0, 0, 1, 1], [], []>} : vector<8x128xf32>, vector<128x384xf32>, vector<8x384xf32> -> vector<8x384xf32>
    %21 = vector.extract_strided_slice %19 {offsets = [0, 0], sizes = [8, 256], strides = [1, 1]} : vector<8x384xf32> to vector<8x256xf32>
    %22 = vector.extract_strided_slice %20 {offsets = [0, 0], sizes = [8, 256], strides = [1, 1]} : vector<8x384xf32> to vector<8x256xf32>
    %23 = arith.addf %21, %22 : vector<8x256xf32>
    %24 = arith.negf %23 : vector<8x256xf32>
    %25 = math.exp %24 : vector<8x256xf32>
    %cst_20 = arith.constant 1.000000e+00 : f32
    %26 = vector.broadcast %cst_20 : f32 to vector<8x256xf32>
    %27 = arith.addf %26, %25 : vector<8x256xf32>
    %28 = arith.divf %26, %27 : vector<8x256xf32>
    %29 = vector.extract_strided_slice %28 {offsets = [0, 0], sizes = [8, 128], strides = [1, 1]} : vector<8x256xf32> to vector<8x128xf32>
    %30 = vector.extract_strided_slice %28 {offsets = [0, 128], sizes = [8, 128], strides = [1, 1]} : vector<8x256xf32> to vector<8x128xf32>
    %31 = vector.extract_strided_slice %19 {offsets = [0, 256], sizes = [8, 128], strides = [1, 1]} : vector<8x384xf32> to vector<8x128xf32>
    %32 = vector.extract_strided_slice %20 {offsets = [0, 256], sizes = [8, 128], strides = [1, 1]} : vector<8x384xf32> to vector<8x128xf32>
    %33 = arith.addf %32, %15 : vector<8x128xf32>
    %34 = arith.mulf %29, %33 : vector<8x128xf32>
    %35 = arith.addf %31, %34 : vector<8x128xf32>
    %36 = math.tanh %35 : vector<8x128xf32>
    %cst_21 = arith.constant 1.000000e+00 : f32
    %37 = vector.broadcast %cst_21 : f32 to vector<8x128xf32>
    %38 = arith.subf %37, %30 : vector<8x128xf32>
    %39 = arith.mulf %38, %36 : vector<8x128xf32>
    %40 = arith.mulf %30, %16 : vector<8x128xf32>
    %41 = arith.addf %39, %40 : vector<8x128xf32>
    %c1_i32 = arith.constant 1 : i32
    %42 = arith.index_cast %c1_i32 : i32 to index
    %c0_22 = arith.constant 0 : index
    %c0_23 = arith.constant 0 : index
    %43 = vector.load %arg9[%42, %c0_22, %c0_23] : memref<8x8x384xf32, #tpu.memory_space<vmem>>, vector<1x8x384xf32>
    %44 = vector.shape_cast %43 : vector<1x8x384xf32> to vector<8x384xf32>
    %cst_24 = arith.constant dense<0.000000e+00> : vector<8x384xf32>
    %45 = tpu.matmul %41, %12, %cst_24 {dimension_numbers = #tpu.dot_dimension_numbers<[1], [0], [0], [1], [0, 0, 1, 1], [], []>} : vector<8x128xf32>, vector<128x384xf32>, vector<8x384xf32> -> vector<8x384xf32>
    %46 = vector.extract_strided_slice %44 {offsets = [0, 0], sizes = [8, 256], strides = [1, 1]} : vector<8x384xf32> to vector<8x256xf32>
    %47 = vector.extract_strided_slice %45 {offsets = [0, 0], sizes = [8, 256], strides = [1, 1]} : vector<8x384xf32> to vector<8x256xf32>
    %48 = arith.addf %46, %47 : vector<8x256xf32>
    %49 = arith.negf %48 : vector<8x256xf32>
    %50 = math.exp %49 : vector<8x256xf32>
    %cst_25 = arith.constant 1.000000e+00 : f32
    %51 = vector.broadcast %cst_25 : f32 to vector<8x256xf32>
    %52 = arith.addf %51, %50 : vector<8x256xf32>
    %53 = arith.divf %51, %52 : vector<8x256xf32>
    %54 = vector.extract_strided_slice %53 {offsets = [0, 0], sizes = [8, 128], strides = [1, 1]} : vector<8x256xf32> to vector<8x128xf32>
    %55 = vector.extract_strided_slice %53 {offsets = [0, 128], sizes = [8, 128], strides = [1, 1]} : vector<8x256xf32> to vector<8x128xf32>
    %56 = vector.extract_strided_slice %44 {offsets = [0, 256], sizes = [8, 128], strides = [1, 1]} : vector<8x384xf32> to vector<8x128xf32>
    %57 = vector.extract_strided_slice %45 {offsets = [0, 256], sizes = [8, 128], strides = [1, 1]} : vector<8x384xf32> to vector<8x128xf32>
    %58 = arith.addf %57, %15 : vector<8x128xf32>
    %59 = arith.mulf %54, %58 : vector<8x128xf32>
    %60 = arith.addf %56, %59 : vector<8x128xf32>
    %61 = math.tanh %60 : vector<8x128xf32>
    %cst_26 = arith.constant 1.000000e+00 : f32
    %62 = vector.broadcast %cst_26 : f32 to vector<8x128xf32>
    %63 = arith.subf %62, %55 : vector<8x128xf32>
    %64 = arith.mulf %63, %61 : vector<8x128xf32>
    %65 = arith.mulf %55, %41 : vector<8x128xf32>
    %66 = arith.addf %64, %65 : vector<8x128xf32>
    %c2_i32 = arith.constant 2 : i32
    %67 = arith.index_cast %c2_i32 : i32 to index
    %c0_27 = arith.constant 0 : index
    %c0_28 = arith.constant 0 : index
    %68 = vector.load %arg9[%67, %c0_27, %c0_28] : memref<8x8x384xf32, #tpu.memory_space<vmem>>, vector<1x8x384xf32>
    %69 = vector.shape_cast %68 : vector<1x8x384xf32> to vector<8x384xf32>
    %cst_29 = arith.constant dense<0.000000e+00> : vector<8x384xf32>
    %70 = tpu.matmul %66, %12, %cst_29 {dimension_numbers = #tpu.dot_dimension_numbers<[1], [0], [0], [1], [0, 0, 1, 1], [], []>} : vector<8x128xf32>, vector<128x384xf32>, vector<8x384xf32> -> vector<8x384xf32>
    %71 = vector.extract_strided_slice %69 {offsets = [0, 0], sizes = [8, 256], strides = [1, 1]} : vector<8x384xf32> to vector<8x256xf32>
    %72 = vector.extract_strided_slice %70 {offsets = [0, 0], sizes = [8, 256], strides = [1, 1]} : vector<8x384xf32> to vector<8x256xf32>
    %73 = arith.addf %71, %72 : vector<8x256xf32>
    %74 = arith.negf %73 : vector<8x256xf32>
    %75 = math.exp %74 : vector<8x256xf32>
    %cst_30 = arith.constant 1.000000e+00 : f32
    %76 = vector.broadcast %cst_30 : f32 to vector<8x256xf32>
    %77 = arith.addf %76, %75 : vector<8x256xf32>
    %78 = arith.divf %76, %77 : vector<8x256xf32>
    %79 = vector.extract_strided_slice %78 {offsets = [0, 0], sizes = [8, 128], strides = [1, 1]} : vector<8x256xf32> to vector<8x128xf32>
    %80 = vector.extract_strided_slice %78 {offsets = [0, 128], sizes = [8, 128], strides = [1, 1]} : vector<8x256xf32> to vector<8x128xf32>
    %81 = vector.extract_strided_slice %69 {offsets = [0, 256], sizes = [8, 128], strides = [1, 1]} : vector<8x384xf32> to vector<8x128xf32>
    %82 = vector.extract_strided_slice %70 {offsets = [0, 256], sizes = [8, 128], strides = [1, 1]} : vector<8x384xf32> to vector<8x128xf32>
    %83 = arith.addf %82, %15 : vector<8x128xf32>
    %84 = arith.mulf %79, %83 : vector<8x128xf32>
    %85 = arith.addf %81, %84 : vector<8x128xf32>
    %86 = math.tanh %85 : vector<8x128xf32>
    %cst_31 = arith.constant 1.000000e+00 : f32
    %87 = vector.broadcast %cst_31 : f32 to vector<8x128xf32>
    %88 = arith.subf %87, %80 : vector<8x128xf32>
    %89 = arith.mulf %88, %86 : vector<8x128xf32>
    %90 = arith.mulf %80, %66 : vector<8x128xf32>
    %91 = arith.addf %89, %90 : vector<8x128xf32>
    %c3_i32 = arith.constant 3 : i32
    %92 = arith.index_cast %c3_i32 : i32 to index
    %c0_32 = arith.constant 0 : index
    %c0_33 = arith.constant 0 : index
    %93 = vector.load %arg9[%92, %c0_32, %c0_33] : memref<8x8x384xf32, #tpu.memory_space<vmem>>, vector<1x8x384xf32>
    %94 = vector.shape_cast %93 : vector<1x8x384xf32> to vector<8x384xf32>
    %cst_34 = arith.constant dense<0.000000e+00> : vector<8x384xf32>
    %95 = tpu.matmul %91, %12, %cst_34 {dimension_numbers = #tpu.dot_dimension_numbers<[1], [0], [0], [1], [0, 0, 1, 1], [], []>} : vector<8x128xf32>, vector<128x384xf32>, vector<8x384xf32> -> vector<8x384xf32>
    %96 = vector.extract_strided_slice %94 {offsets = [0, 0], sizes = [8, 256], strides = [1, 1]} : vector<8x384xf32> to vector<8x256xf32>
    %97 = vector.extract_strided_slice %95 {offsets = [0, 0], sizes = [8, 256], strides = [1, 1]} : vector<8x384xf32> to vector<8x256xf32>
    %98 = arith.addf %96, %97 : vector<8x256xf32>
    %99 = arith.negf %98 : vector<8x256xf32>
    %100 = math.exp %99 : vector<8x256xf32>
    %cst_35 = arith.constant 1.000000e+00 : f32
    %101 = vector.broadcast %cst_35 : f32 to vector<8x256xf32>
    %102 = arith.addf %101, %100 : vector<8x256xf32>
    %103 = arith.divf %101, %102 : vector<8x256xf32>
    %104 = vector.extract_strided_slice %103 {offsets = [0, 0], sizes = [8, 128], strides = [1, 1]} : vector<8x256xf32> to vector<8x128xf32>
    %105 = vector.extract_strided_slice %103 {offsets = [0, 128], sizes = [8, 128], strides = [1, 1]} : vector<8x256xf32> to vector<8x128xf32>
    %106 = vector.extract_strided_slice %94 {offsets = [0, 256], sizes = [8, 128], strides = [1, 1]} : vector<8x384xf32> to vector<8x128xf32>
    %107 = vector.extract_strided_slice %95 {offsets = [0, 256], sizes = [8, 128], strides = [1, 1]} : vector<8x384xf32> to vector<8x128xf32>
    %108 = arith.addf %107, %15 : vector<8x128xf32>
    %109 = arith.mulf %104, %108 : vector<8x128xf32>
    %110 = arith.addf %106, %109 : vector<8x128xf32>
    %111 = math.tanh %110 : vector<8x128xf32>
    %cst_36 = arith.constant 1.000000e+00 : f32
    %112 = vector.broadcast %cst_36 : f32 to vector<8x128xf32>
    %113 = arith.subf %112, %105 : vector<8x128xf32>
    %114 = arith.mulf %113, %111 : vector<8x128xf32>
    %115 = arith.mulf %105, %91 : vector<8x128xf32>
    %116 = arith.addf %114, %115 : vector<8x128xf32>
    %c4_i32 = arith.constant 4 : i32
    %117 = arith.index_cast %c4_i32 : i32 to index
    %c0_37 = arith.constant 0 : index
    %c0_38 = arith.constant 0 : index
    %118 = vector.load %arg9[%117, %c0_37, %c0_38] : memref<8x8x384xf32, #tpu.memory_space<vmem>>, vector<1x8x384xf32>
    %119 = vector.shape_cast %118 : vector<1x8x384xf32> to vector<8x384xf32>
    %cst_39 = arith.constant dense<0.000000e+00> : vector<8x384xf32>
    %120 = tpu.matmul %116, %12, %cst_39 {dimension_numbers = #tpu.dot_dimension_numbers<[1], [0], [0], [1], [0, 0, 1, 1], [], []>} : vector<8x128xf32>, vector<128x384xf32>, vector<8x384xf32> -> vector<8x384xf32>
    %121 = vector.extract_strided_slice %119 {offsets = [0, 0], sizes = [8, 256], strides = [1, 1]} : vector<8x384xf32> to vector<8x256xf32>
    %122 = vector.extract_strided_slice %120 {offsets = [0, 0], sizes = [8, 256], strides = [1, 1]} : vector<8x384xf32> to vector<8x256xf32>
    %123 = arith.addf %121, %122 : vector<8x256xf32>
    %124 = arith.negf %123 : vector<8x256xf32>
    %125 = math.exp %124 : vector<8x256xf32>
    %cst_40 = arith.constant 1.000000e+00 : f32
    %126 = vector.broadcast %cst_40 : f32 to vector<8x256xf32>
    %127 = arith.addf %126, %125 : vector<8x256xf32>
    %128 = arith.divf %126, %127 : vector<8x256xf32>
    %129 = vector.extract_strided_slice %128 {offsets = [0, 0], sizes = [8, 128], strides = [1, 1]} : vector<8x256xf32> to vector<8x128xf32>
    %130 = vector.extract_strided_slice %128 {offsets = [0, 128], sizes = [8, 128], strides = [1, 1]} : vector<8x256xf32> to vector<8x128xf32>
    %131 = vector.extract_strided_slice %119 {offsets = [0, 256], sizes = [8, 128], strides = [1, 1]} : vector<8x384xf32> to vector<8x128xf32>
    %132 = vector.extract_strided_slice %120 {offsets = [0, 256], sizes = [8, 128], strides = [1, 1]} : vector<8x384xf32> to vector<8x128xf32>
    %133 = arith.addf %132, %15 : vector<8x128xf32>
    %134 = arith.mulf %129, %133 : vector<8x128xf32>
    %135 = arith.addf %131, %134 : vector<8x128xf32>
    %136 = math.tanh %135 : vector<8x128xf32>
    %cst_41 = arith.constant 1.000000e+00 : f32
    %137 = vector.broadcast %cst_41 : f32 to vector<8x128xf32>
    %138 = arith.subf %137, %130 : vector<8x128xf32>
    %139 = arith.mulf %138, %136 : vector<8x128xf32>
    %140 = arith.mulf %130, %116 : vector<8x128xf32>
    %141 = arith.addf %139, %140 : vector<8x128xf32>
    %c5_i32 = arith.constant 5 : i32
    %142 = arith.index_cast %c5_i32 : i32 to index
    %c0_42 = arith.constant 0 : index
    %c0_43 = arith.constant 0 : index
    %143 = vector.load %arg9[%142, %c0_42, %c0_43] : memref<8x8x384xf32, #tpu.memory_space<vmem>>, vector<1x8x384xf32>
    %144 = vector.shape_cast %143 : vector<1x8x384xf32> to vector<8x384xf32>
    %cst_44 = arith.constant dense<0.000000e+00> : vector<8x384xf32>
    %145 = tpu.matmul %141, %12, %cst_44 {dimension_numbers = #tpu.dot_dimension_numbers<[1], [0], [0], [1], [0, 0, 1, 1], [], []>} : vector<8x128xf32>, vector<128x384xf32>, vector<8x384xf32> -> vector<8x384xf32>
    %146 = vector.extract_strided_slice %144 {offsets = [0, 0], sizes = [8, 256], strides = [1, 1]} : vector<8x384xf32> to vector<8x256xf32>
    %147 = vector.extract_strided_slice %145 {offsets = [0, 0], sizes = [8, 256], strides = [1, 1]} : vector<8x384xf32> to vector<8x256xf32>
    %148 = arith.addf %146, %147 : vector<8x256xf32>
    %149 = arith.negf %148 : vector<8x256xf32>
    %150 = math.exp %149 : vector<8x256xf32>
    %cst_45 = arith.constant 1.000000e+00 : f32
    %151 = vector.broadcast %cst_45 : f32 to vector<8x256xf32>
    %152 = arith.addf %151, %150 : vector<8x256xf32>
    %153 = arith.divf %151, %152 : vector<8x256xf32>
    %154 = vector.extract_strided_slice %153 {offsets = [0, 0], sizes = [8, 128], strides = [1, 1]} : vector<8x256xf32> to vector<8x128xf32>
    %155 = vector.extract_strided_slice %153 {offsets = [0, 128], sizes = [8, 128], strides = [1, 1]} : vector<8x256xf32> to vector<8x128xf32>
    %156 = vector.extract_strided_slice %144 {offsets = [0, 256], sizes = [8, 128], strides = [1, 1]} : vector<8x384xf32> to vector<8x128xf32>
    %157 = vector.extract_strided_slice %145 {offsets = [0, 256], sizes = [8, 128], strides = [1, 1]} : vector<8x384xf32> to vector<8x128xf32>
    %158 = arith.addf %157, %15 : vector<8x128xf32>
    %159 = arith.mulf %154, %158 : vector<8x128xf32>
    %160 = arith.addf %156, %159 : vector<8x128xf32>
    %161 = math.tanh %160 : vector<8x128xf32>
    %cst_46 = arith.constant 1.000000e+00 : f32
    %162 = vector.broadcast %cst_46 : f32 to vector<8x128xf32>
    %163 = arith.subf %162, %155 : vector<8x128xf32>
    %164 = arith.mulf %163, %161 : vector<8x128xf32>
    %165 = arith.mulf %155, %141 : vector<8x128xf32>
    %166 = arith.addf %164, %165 : vector<8x128xf32>
    %c6_i32 = arith.constant 6 : i32
    %167 = arith.index_cast %c6_i32 : i32 to index
    %c0_47 = arith.constant 0 : index
    %c0_48 = arith.constant 0 : index
    %168 = vector.load %arg9[%167, %c0_47, %c0_48] : memref<8x8x384xf32, #tpu.memory_space<vmem>>, vector<1x8x384xf32>
    %169 = vector.shape_cast %168 : vector<1x8x384xf32> to vector<8x384xf32>
    %cst_49 = arith.constant dense<0.000000e+00> : vector<8x384xf32>
    %170 = tpu.matmul %166, %12, %cst_49 {dimension_numbers = #tpu.dot_dimension_numbers<[1], [0], [0], [1], [0, 0, 1, 1], [], []>} : vector<8x128xf32>, vector<128x384xf32>, vector<8x384xf32> -> vector<8x384xf32>
    %171 = vector.extract_strided_slice %169 {offsets = [0, 0], sizes = [8, 256], strides = [1, 1]} : vector<8x384xf32> to vector<8x256xf32>
    %172 = vector.extract_strided_slice %170 {offsets = [0, 0], sizes = [8, 256], strides = [1, 1]} : vector<8x384xf32> to vector<8x256xf32>
    %173 = arith.addf %171, %172 : vector<8x256xf32>
    %174 = arith.negf %173 : vector<8x256xf32>
    %175 = math.exp %174 : vector<8x256xf32>
    %cst_50 = arith.constant 1.000000e+00 : f32
    %176 = vector.broadcast %cst_50 : f32 to vector<8x256xf32>
    %177 = arith.addf %176, %175 : vector<8x256xf32>
    %178 = arith.divf %176, %177 : vector<8x256xf32>
    %179 = vector.extract_strided_slice %178 {offsets = [0, 0], sizes = [8, 128], strides = [1, 1]} : vector<8x256xf32> to vector<8x128xf32>
    %180 = vector.extract_strided_slice %178 {offsets = [0, 128], sizes = [8, 128], strides = [1, 1]} : vector<8x256xf32> to vector<8x128xf32>
    %181 = vector.extract_strided_slice %169 {offsets = [0, 256], sizes = [8, 128], strides = [1, 1]} : vector<8x384xf32> to vector<8x128xf32>
    %182 = vector.extract_strided_slice %170 {offsets = [0, 256], sizes = [8, 128], strides = [1, 1]} : vector<8x384xf32> to vector<8x128xf32>
    %183 = arith.addf %182, %15 : vector<8x128xf32>
    %184 = arith.mulf %179, %183 : vector<8x128xf32>
    %185 = arith.addf %181, %184 : vector<8x128xf32>
    %186 = math.tanh %185 : vector<8x128xf32>
    %cst_51 = arith.constant 1.000000e+00 : f32
    %187 = vector.broadcast %cst_51 : f32 to vector<8x128xf32>
    %188 = arith.subf %187, %180 : vector<8x128xf32>
    %189 = arith.mulf %188, %186 : vector<8x128xf32>
    %190 = arith.mulf %180, %166 : vector<8x128xf32>
    %191 = arith.addf %189, %190 : vector<8x128xf32>
    %c7_i32 = arith.constant 7 : i32
    %192 = arith.index_cast %c7_i32 : i32 to index
    %c0_52 = arith.constant 0 : index
    %c0_53 = arith.constant 0 : index
    %193 = vector.load %arg9[%192, %c0_52, %c0_53] : memref<8x8x384xf32, #tpu.memory_space<vmem>>, vector<1x8x384xf32>
    %194 = vector.shape_cast %193 : vector<1x8x384xf32> to vector<8x384xf32>
    %cst_54 = arith.constant dense<0.000000e+00> : vector<8x384xf32>
    %195 = tpu.matmul %191, %12, %cst_54 {dimension_numbers = #tpu.dot_dimension_numbers<[1], [0], [0], [1], [0, 0, 1, 1], [], []>} : vector<8x128xf32>, vector<128x384xf32>, vector<8x384xf32> -> vector<8x384xf32>
    %196 = vector.extract_strided_slice %194 {offsets = [0, 0], sizes = [8, 256], strides = [1, 1]} : vector<8x384xf32> to vector<8x256xf32>
    %197 = vector.extract_strided_slice %195 {offsets = [0, 0], sizes = [8, 256], strides = [1, 1]} : vector<8x384xf32> to vector<8x256xf32>
    %198 = arith.addf %196, %197 : vector<8x256xf32>
    %199 = arith.negf %198 : vector<8x256xf32>
    %200 = math.exp %199 : vector<8x256xf32>
    %cst_55 = arith.constant 1.000000e+00 : f32
    %201 = vector.broadcast %cst_55 : f32 to vector<8x256xf32>
    %202 = arith.addf %201, %200 : vector<8x256xf32>
    %203 = arith.divf %201, %202 : vector<8x256xf32>
    %204 = vector.extract_strided_slice %203 {offsets = [0, 0], sizes = [8, 128], strides = [1, 1]} : vector<8x256xf32> to vector<8x128xf32>
    %205 = vector.extract_strided_slice %203 {offsets = [0, 128], sizes = [8, 128], strides = [1, 1]} : vector<8x256xf32> to vector<8x128xf32>
    %206 = vector.extract_strided_slice %194 {offsets = [0, 256], sizes = [8, 128], strides = [1, 1]} : vector<8x384xf32> to vector<8x128xf32>
    %207 = vector.extract_strided_slice %195 {offsets = [0, 256], sizes = [8, 128], strides = [1, 1]} : vector<8x384xf32> to vector<8x128xf32>
    %208 = arith.addf %207, %15 : vector<8x128xf32>
    %209 = arith.mulf %204, %208 : vector<8x128xf32>
    %210 = arith.addf %206, %209 : vector<8x128xf32>
    %211 = math.tanh %210 : vector<8x128xf32>
    %cst_56 = arith.constant 1.000000e+00 : f32
    %212 = vector.broadcast %cst_56 : f32 to vector<8x128xf32>
    %213 = arith.subf %212, %205 : vector<8x128xf32>
    %214 = arith.mulf %213, %211 : vector<8x128xf32>
    %215 = arith.mulf %205, %191 : vector<8x128xf32>
    %216 = arith.addf %214, %215 : vector<8x128xf32>
    %c8_i32 = arith.constant 8 : i32
    %c0_57 = arith.constant 0 : index
    %c0_58 = arith.constant 0 : index
    %217 = vector.load %arg10[%c0_57, %c0_58] : memref<8x128xf32, #tpu.memory_space<vmem>>, vector<8x128xf32>
    tpu.vector_store %arg10[%c0_57, %c0_58], %216 {strides = array<i32>} : memref<8x128xf32, #tpu.memory_space<vmem>>, vector<8x128xf32>,
    %c0_i32_59 = arith.constant 0 : i32
    %218 = arith.cmpi eq, %arg0, %c0_i32_59 : i32
    %219 = arith.extui %218 : i1 to i32
    %c0_i32_60 = arith.constant 0 : i32
    %220 = arith.cmpi ne, %219, %c0_i32_60 : i32
    scf.if %220 {
      %c0_61 = arith.constant 0 : index
      %c0_62 = arith.constant 0 : index
      %221 = vector.load %arg6[%c0_61, %c0_62] : memref<128x128xf32, #tpu.memory_space<vmem>>, vector<128x128xf32>
      %cst_63 = arith.constant dense<0.000000e+00> : vector<8x128xf32>
      %222 = tpu.matmul %216, %221, %cst_63 {dimension_numbers = #tpu.dot_dimension_numbers<[1], [0], [0], [1], [0, 0, 1, 1], [], []>} : vector<8x128xf32>, vector<128x128xf32>, vector<8x128xf32> -> vector<8x128xf32>
      %c0_64 = arith.constant 0 : index
      %c0_65 = arith.constant 0 : index
      %223 = vector.load %arg7[%c0_64, %c0_65] : memref<1x128xf32, #tpu.memory_space<vmem>>, vector<1x128xf32>
      %224 = vector.broadcast %223 : vector<1x128xf32> to vector<8x128xf32>
      %225 = arith.addf %222, %224 : vector<8x128xf32>
      %c0_66 = arith.constant 0 : index
      %c0_67 = arith.constant 0 : index
      %226 = vector.load %arg8[%c0_66, %c0_67] : memref<8x128xf32, #tpu.memory_space<vmem>>, vector<8x128xf32>
      tpu.vector_store %arg8[%c0_66, %c0_67], %225 {strides = array<i32>} : memref<8x128xf32, #tpu.memory_space<vmem>>, vector<8x128xf32>,
    } else {
    }
    return
  }
  func.func @transform_0(%arg0: i32) -> (i32, i32, i32) {
    %c0_i32 = arith.constant 0 : i32
    %c0_i32_0 = arith.constant 0 : i32
    %c0_i32_1 = arith.constant 0 : i32
    return %arg0, %c0_i32, %c0_i32_0 : i32, i32, i32
  }
  func.func @transform_1(%arg0: i32) -> (i32, i32) {
    %c0_i32 = arith.constant 0 : i32
    %c0_i32_0 = arith.constant 0 : i32
    %c0_i32_1 = arith.constant 0 : i32
    return %c0_i32, %c0_i32_0 : i32, i32
  }
  func.func @transform_2(%arg0: i32) -> (i32, i32) {
    %c0_i32 = arith.constant 0 : i32
    %c0_i32_0 = arith.constant 0 : i32
    %c0_i32_1 = arith.constant 0 : i32
    return %c0_i32, %c0_i32_0 : i32, i32
  }
  func.func @transform_3(%arg0: i32) -> (i32, i32) {
    %c0_i32 = arith.constant 0 : i32
    %c0_i32_0 = arith.constant 0 : i32
    %c0_i32_1 = arith.constant 0 : i32
    return %c0_i32, %c0_i32_0 : i32, i32
  }
  func.func @transform_4(%arg0: i32) -> (i32, i32) {
    %c0_i32 = arith.constant 0 : i32
    %c0_i32_0 = arith.constant 0 : i32
    %c0_i32_1 = arith.constant 0 : i32
    return %c0_i32, %c0_i32_0 : i32, i32
  }
  func.func @transform_5(%arg0: i32) -> (i32, i32) {
    %c0_i32 = arith.constant 0 : i32
    %c0_i32_0 = arith.constant 0 : i32
    %c0_i32_1 = arith.constant 0 : i32
    return %c0_i32, %c0_i32_0 : i32, i32
  }
  func.func @transform_6(%arg0: i32) -> (i32, i32) {
    %c0_i32 = arith.constant 0 : i32
    %c0_i32_0 = arith.constant 0 : i32
    %c0_i32_1 = arith.constant 0 : i32
    return %c0_i32, %c0_i32_0 : i32, i32
  }
  func.func @transform_7(%arg0: i32) -> (i32, i32) {
    %c0_i32 = arith.constant 0 : i32
    %c0_i32_0 = arith.constant 0 : i32
    %c0_i32_1 = arith.constant 0 : i32
    return %c0_i32, %c0_i32_0 : i32, i32
  }
}

</mosaic_0001>

<llo_original>
// kernel: gru_model_forward.1
$region0: #{gru_model_forward.1}
  #allocation0 [shape = 'u32[]', space=smem, size = 0x4, offset = 0x4, fixed_abs, tag = 'smem constant byte address 0x4 - core index']
  #allocation1 [shape = 'u32[144,128]{1,0:T(1,128)}', space=vmem, size = 0x12000, scoped, tag = 'internal scratch']
  #allocation2 [shape = 'f32[8,8,384]{2,1,0:T(8,128)}', space=vmem, size = 0x18000, scoped, tag = 'scratch operand']
  #allocation3 [shape = 'f32[8,128]{1,0:T(8,128)}', space=vmem, size = 0x1000, scoped, tag = 'scratch operand']
  %s0 = inlined_call_operand.vmem [shape: f32[8,8,128], index: 0, kind: input, shape index: {}]
  %s1 = inlined_call_operand.hbm [shape: f32[128,384], index: 1, kind: input, shape index: {}]
  %s2 = inlined_call_operand.hbm [shape: f32[128,384], index: 2, kind: input, shape index: {}]
  %s3 = inlined_call_operand.vmem [shape: f32[1,384], index: 3, kind: input, shape index: {}]
  %s4 = inlined_call_operand.vmem [shape: f32[1,128], index: 4, kind: input, shape index: {}]
  %s5 = inlined_call_operand.hbm [shape: f32[128,128], index: 5, kind: input, shape index: {}]
  %s6 = inlined_call_operand.vmem [shape: f32[1,128], index: 6, kind: input, shape index: {}]
  %s7 = inlined_call_operand.vmem [shape: f32[8,128], index: 7, kind: output, shape index: {}]
  %s8 = sld [smem:[#allocation0]]
  $region58: #{gru_model_forward.1} parent=0
    _
  %s10 = ssub.s32 1, %s8
  %s11 = scalar_select 0, %s10, %s8
  $region1: #{gru_model_forward.1} parent=0
    #allocation4 [shape = 'u8[196608]{0}', space=vmem, size = 0x30000, scoped, tag = 'input window, operand 1, single buffered']
    #allocation5 [shape = 's32[1]{0}', space=sflag, size = 0x4, scoped, tag = 'scoped memory for gru_model_forward.1']
    #allocation6 [shape = 'u8[196608]{0}', space=vmem, size = 0x30000, scoped, tag = 'input window, operand 2, single buffered']
    #allocation7 [shape = 's32[1]{0}', space=sflag, size = 0x4, scoped, tag = 'scoped memory for gru_model_forward.1']
    #allocation8 [shape = 'u8[65536]{0}', space=vmem, size = 0x10000, scoped, tag = 'input window, operand 5, single buffered']
    %12 = vsyncpa [#allocation5], 0
    %13 = vsyncpa [#allocation7], 0
    // Predicated region
    $region2: #{gru_model_forward.1} parent=1 // pred_check
      _
    $region3: #{gru_model_forward.1} parent=1 // pred_check_branch
      %15 = sbr.rel (0) target = $region5
    $region4: #{gru_model_forward.1} parent=1 // pred_region
      _
    $region5: #{gru_model_forward.1} parent=1 // pred_fallthru
      _
    // Predicated region
    $region6: #{gru_model_forward.1} parent=1 // pred_check
      _
    $region7: #{gru_model_forward.1} parent=1 // pred_check_branch
      %17 = sbr.rel (0) target = $region9
    $region8: #{gru_model_forward.1} parent=1 // pred_region
      %s19 = ssub.s32 6144, 6144
      %20 = vsyncadd [#allocation5], %s19
      %s21 = sshll.u32 [#allocation4], 4
      %s22 = int_to_ptr.vmem [resolvable:$true] %s21
      %27 = dma.hbm_to_vmem [thread:$0]  %s1, 6144, %s22, [#allocation5], 384, 384, 24
    $region9: #{gru_model_forward.1} parent=1 // pred_fallthru
      _
    // Predicated region
    $region10: #{gru_model_forward.1} parent=1 // pred_check
      _
    $region11: #{gru_model_forward.1} parent=1 // pred_check_branch
      %29 = sbr.rel (0) target = $region13
    $region12: #{gru_model_forward.1} parent=1 // pred_region
      %s31 = ssub.s32 6144, 6144
      %32 = vsyncadd [#allocation7], %s31
      %s33 = sshll.u32 [#allocation6], 4
      %s34 = int_to_ptr.vmem [resolvable:$true] %s33
      %39 = dma.hbm_to_vmem [thread:$0]  %s2, 6144, %s34, [#allocation7], 384, 384, 24
    $region13: #{gru_model_forward.1} parent=1 // pred_fallthru
      _
    // Predicated region
    $region14: #{gru_model_forward.1} parent=1 // pred_check
      _
    $region15: #{gru_model_forward.1} parent=1 // pred_check_branch
      %41 = sbr.rel (0) target = $region17
    $region16: #{gru_model_forward.1} parent=1 // pred_region
      _
    $region17: #{gru_model_forward.1} parent=1 // pred_fallthru
      _
    // Predicated region
    $region18: #{gru_model_forward.1} parent=1 // pred_check
      _
    $region19: #{gru_model_forward.1} parent=1 // pred_check_branch
      %43 = sbr.rel (0) target = $region21
    $region20: #{gru_model_forward.1} parent=1 // pred_region
      _
    $region21: #{gru_model_forward.1} parent=1 // pred_fallthru
      _
    // Predicated region
    $region22: #{gru_model_forward.1} parent=1 // pred_check
      _
    $region23: #{gru_model_forward.1} parent=1 // pred_check_branch
      %45 = sbr.rel (0) target = $region25
    $region24: #{gru_model_forward.1} parent=1 // pred_region
      %s47 = ssub.s32 2048, 2048
      %48 = vsyncadd [#allocation7], %s47
      %s49 = sshll.u32 [#allocation8], 4
      %s50 = int_to_ptr.vmem [resolvable:$true] %s49
      %55 = dma.hbm_to_vmem [thread:$0]  %s5, 2048, %s50, [#allocation7], 128, 128, 8
    $region25: #{gru_model_forward.1} parent=1 // pred_fallthru
      _
    // Predicated region
    $region26: #{gru_model_forward.1} parent=1 // pred_check
      _
    $region27: #{gru_model_forward.1} parent=1 // pred_check_branch
      %57 = sbr.rel (0) target = $region29
    $region28: #{gru_model_forward.1} parent=1 // pred_region
      _
    $region29: #{gru_model_forward.1} parent=1 // pred_fallthru
      _
    // Predicated region
    $region30: #{gru_model_forward.1} parent=1 // pred_check
      _
    $region31: #{gru_model_forward.1} parent=1 // pred_check_branch
      %59 = sbr.rel (0) target = $region33
    $region32: #{gru_model_forward.1} parent=1 // pred_region
      %60 = dma.done [#allocation5], 6144
    $region33: #{gru_model_forward.1} parent=1 // pred_fallthru
      _
    // Predicated region
    $region34: #{gru_model_forward.1} parent=1 // pred_check
      _
    $region35: #{gru_model_forward.1} parent=1 // pred_check_branch
      %62 = sbr.rel (0) target = $region37
    $region36: #{gru_model_forward.1} parent=1 // pred_region
      %63 = dma.done [#allocation7], 6144
    $region37: #{gru_model_forward.1} parent=1 // pred_fallthru
      _
    // Predicated region
    $region38: #{gru_model_forward.1} parent=1 // pred_check
      _
    $region39: #{gru_model_forward.1} parent=1 // pred_check_branch
      %65 = sbr.rel (0) target = $region41
    $region40: #{gru_model_forward.1} parent=1 // pred_region
      %66 = dma.done [#allocation7], 2048
    $region41: #{gru_model_forward.1} parent=1 // pred_fallthru
      _
    %p67 = scmp.eq.s32.totalorder 0, 0
    // Predicated region
    $region42: #{gru_model_forward.1} parent=1 // pred_check
      %p68 = pneg %p67
    $region43: #{gru_model_forward.1} parent=1 // pred_check_branch
      %70 = sbr.rel (%p68) target = $region45
    $region44: #{gru_model_forward.1} parent=1 // pred_region
      %71 = vst [vmem:[#allocation3] sm:$0xff] 0.0
    $region45: #{gru_model_forward.1} parent=1 // pred_fallthru
      _
    %v72 = vld [vmem:[%s0] sm:$0xff]
    %v73 = vld [vmem:[%s0 + $0x8] sm:$0xff]
    %v74 = vld [vmem:[%s0 + $0x10] sm:$0xff]
    %v75 = vld [vmem:[%s0 + $0x18] sm:$0xff]
    %v76 = vld [vmem:[%s0 + $0x20] sm:$0xff]
    %v77 = vld [vmem:[%s0 + $0x28] sm:$0xff]
    %v78 = vld [vmem:[%s0 + $0x30] sm:$0xff]
    %v79 = vld [vmem:[%s0 + $0x38] sm:$0xff]
    %v80 = vld [vmem:[#allocation4] sm:$0xff]
    %v81 = vld [vmem:[#allocation4 + $0x8] sm:$0xff]
    %v82 = vld [vmem:[#allocation4 + $0x10] sm:$0xff]
    %v83 = vld [vmem:[#allocation4 + $0x18] sm:$0xff]
    %v84 = vld [vmem:[#allocation4 + $0x20] sm:$0xff]
    %v85 = vld [vmem:[#allocation4 + $0x28] sm:$0xff]
    %v86 = vld [vmem:[#allocation4 + $0x30] sm:$0xff]
    %v87 = vld [vmem:[#allocation4 + $0x38] sm:$0xff]
    %v88 = vld [vmem:[#allocation4 + $0x40] sm:$0xff]
    %v89 = vld [vmem:[#allocation4 + $0x48] sm:$0xff]
    %v90 = vld [vmem:[#allocation4 + $0x50] sm:$0xff]
    %v91 = vld [vmem:[#allocation4 + $0x58] sm:$0xff]
    %v92 = vld [vmem:[#allocation4 + $0x60] sm:$0xff]
    %v93 = vld [vmem:[#allocation4 + $0x68] sm:$0xff]
    %v94 = vld [vmem:[#allocation4 + $0x70] sm:$0xff]
    %v95 = vld [vmem:[#allocation4 + $0x78] sm:$0xff]
    %v96 = vld [vmem:[#allocation4 + $0x80] sm:$0xff]
    %v97 = vld [vmem:[#allocation4 + $0x88] sm:$0xff]
    %v98 = vld [vmem:[#allocation4 + $0x90] sm:$0xff]
    %v99 = vld [vmem:[#allocation4 + $0x98] sm:$0xff]
    %v100 = vld [vmem:[#allocation4 + $0xa0] sm:$0xff]
    %v101 = vld [vmem:[#allocation4 + $0xa8] sm:$0xff]
    %v102 = vld [vmem:[#allocation4 + $0xb0] sm:$0xff]
    %v103 = vld [vmem:[#allocation4 + $0xb8] sm:$0xff]
    %v104 = vld [vmem:[#allocation4 + $0xc0] sm:$0xff]
    %v105 = vld [vmem:[#allocation4 + $0xc8] sm:$0xff]
    %v106 = vld [vmem:[#allocation4 + $0xd0] sm:$0xff]
    %v107 = vld [vmem:[#allocation4 + $0xd8] sm:$0xff]
    %v108 = vld [vmem:[#allocation4 + $0xe0] sm:$0xff]
    %v109 = vld [vmem:[#allocation4 + $0xe8] sm:$0xff]
    %v110 = vld [vmem:[#allocation4 + $0xf0] sm:$0xff]
    %v111 = vld [vmem:[#allocation4 + $0xf8] sm:$0xff]
    %v112 = vld [vmem:[#allocation4 + $0x100] sm:$0xff]
    %v113 = vld [vmem:[#allocation4 + $0x108] sm:$0xff]
    %v114 = vld [vmem:[#allocation4 + $0x110] sm:$0xff]
    %v115 = vld [vmem:[#allocation4 + $0x118] sm:$0xff]
    %v116 = vld [vmem:[#allocation4 + $0x120] sm:$0xff]
    %v117 = vld [vmem:[#allocation4 + $0x128] sm:$0xff]
    %v118 = vld [vmem:[#allocation4 + $0x130] sm:$0xff]
    %v119 = vld [vmem:[#allocation4 + $0x138] sm:$0xff]
    %v120 = vld [vmem:[#allocation4 + $0x140] sm:$0xff]
    %v121 = vld [vmem:[#allocation4 + $0x148] sm:$0xff]
    %v122 = vld [vmem:[#allocation4 + $0x150] sm:$0xff]
    %v123 = vld [vmem:[#allocation4 + $0x158] sm:$0xff]
    %v124 = vld [vmem:[#allocation4 + $0x160] sm:$0xff]
    %v125 = vld [vmem:[#allocation4 + $0x168] sm:$0xff]
    %v126 = vld [vmem:[#allocation4 + $0x170] sm:$0xff]
    %v127 = vld [vmem:[#allocation4 + $0x178] sm:$0xff]
    %v128 = vld [vmem:[%s3] sm:$0x7]
    %v130 = vlaneseq
    %v131 = vshrl.u32 %v130, 7
    %v132 = vsub.s32 0, %v131
    %v133 = vrot.slane %v128, %v132
    %v134 = vlaneseq
    %v135 = vshrl.u32 %v134, 7
    %v136 = vsub.s32 1, %v135
    %v137 = vrot.slane %v128, %v136
    %v138 = vlaneseq
    %v139 = vshrl.u32 %v138, 7
    %v140 = vsub.s32 2, %v139
    %v141 = vrot.slane %v128, %v140
    %145 = vmatprep.subr.mxu0 %v81
    %146 = vmatpush1.msra.mxu0 %v80
    %147 = vmatprep.subr.mxu0 %v84
    %148 = vmatpush1.msra.mxu0 %v83
    %149 = vmatprep.subr.mxu0 %v87
    %150 = vmatpush1.msra.mxu0 %v86
    %151 = vmatprep.subr.mxu0 %v90
    %152 = vmatpush1.msra.mxu0 %v89
    %153 = vmatprep.subr.mxu0 %v93
    %154 = vmatpush1.msra.mxu0 %v92
    %155 = vmatprep.subr.mxu0 %v96
    %156 = vmatpush1.msra.mxu0 %v95
    %157 = vmatprep.subr.mxu0 %v99
    %158 = vmatpush1.msra.mxu0 %v98
    %159 = vmatprep.subr.mxu0 %v102
    %160 = vmatpush1.msra.mxu0 %v101
    %161 = vmatprep.subr.mxu0 %v105
    %162 = vmatpush1.msra.mxu0 %v104
    %163 = vmatprep.subr.mxu0 %v108
    %164 = vmatpush1.msra.mxu0 %v107
    %165 = vmatprep.subr.mxu0 %v111
    %166 = vmatpush1.msra.mxu0 %v110
    %167 = vmatprep.subr.mxu0 %v114
    %168 = vmatpush1.msra.mxu0 %v113
    %169 = vmatprep.subr.mxu0 %v117
    %170 = vmatpush1.msra.mxu0 %v116
    %171 = vmatprep.subr.mxu0 %v120
    %172 = vmatpush1.msra.mxu0 %v119
    %173 = vmatprep.subr.mxu0 %v123
    %174 = vmatpush1.msra.mxu0 %v122
    %175 = vmatprep.subr.mxu0 %v126
    %176 = vmatpush1.msra.mxu0 %v125
    %177 = vmatprep.subr.mxu0 0.0
    %178 = vmatpush1.msra.mxu0 0.0
    %179 = vmatprep.subr.mxu0 0.0
    %180 = vmatpush1.msra.mxu0 0.0
    %181 = vmatprep.subr.mxu0 0.0
    %182 = vmatpush1.msra.mxu0 0.0
    %183 = vmatprep.subr.mxu0 0.0
    %184 = vmatpush1.msra.mxu0 0.0
    %185 = vmatprep.subr.mxu0 0.0
    %186 = vmatpush1.msra.mxu0 0.0
    %187 = vmatprep.subr.mxu0 0.0
    %188 = vmatpush1.msra.mxu0 0.0
    %189 = vmatprep.subr.mxu0 0.0
    %190 = vmatpush1.msra.mxu0 0.0
    %191 = vmatprep.subr.mxu0 0.0
    %192 = vmatpush1.msra.mxu0 0.0
    %193 = vmatprep.subr.mxu0 0.0
    %194 = vmatpush1.msra.mxu0 0.0
    %195 = vmatprep.subr.mxu0 0.0
    %196 = vmatpush1.msra.mxu0 0.0
    %197 = vmatprep.subr.mxu0 0.0
    %198 = vmatpush1.msra.mxu0 0.0
    %199 = vmatprep.subr.mxu0 0.0
    %200 = vmatpush1.msra.mxu0 0.0
    %201 = vmatprep.subr.mxu0 0.0
    %202 = vmatpush1.msra.mxu0 0.0
    %203 = vmatprep.subr.mxu0 0.0
    %204 = vmatpush1.msra.mxu0 0.0
    %205 = vmatprep.subr.mxu0 0.0
    %206 = vmatpush1.msra.mxu0 0.0
    %207 = vmatprep.subr.mxu0 0.0
    %208 = vmatpush1.msra.mxu0 0.0
    %209 = vmatprep.mubr.f32.mxu0 0.0
    %210 = vmatmul.mubr.f32.gmra.mrb[0].mxu0 %v72
    %v211 = vpop.f32.mrb[0].mxu0
    %v212 = vadd.f32 %v133, %v211
    %v213 = vpop.f32.mrb[0].mxu0
    %v214 = vadd.f32 %v137, %v213
    %215 = vmatprep.mubr.f32.mxu0 0.0
    %216 = vmatmul.mubr.f32.gmra.mrb[0].mxu0 %v73
    %v217 = vpop.f32.mrb[0].mxu0
    %v218 = vadd.f32 %v133, %v217
    %v219 = vpop.f32.mrb[0].mxu0
    %v220 = vadd.f32 %v137, %v219
    %221 = vmatprep.mubr.f32.mxu0 0.0
    %222 = vmatmul.mubr.f32.gmra.mrb[0].mxu0 %v74
    %v223 = vpop.f32.mrb[0].mxu0
    %v224 = vadd.f32 %v133, %v223
    %v225 = vpop.f32.mrb[0].mxu0
    %v226 = vadd.f32 %v137, %v225
    %227 = vmatprep.mubr.f32.mxu0 0.0
    %228 = vmatmul.mubr.f32.gmra.mrb[0].mxu0 %v75
    %v229 = vpop.f32.mrb[0].mxu0
    %v230 = vadd.f32 %v133, %v229
    %v231 = vpop.f32.mrb[0].mxu0
    %v232 = vadd.f32 %v137, %v231
    %233 = vmatprep.mubr.f32.mxu0 0.0
    %234 = vmatmul.mubr.f32.gmra.mrb[0].mxu0 %v76
    %v235 = vpop.f32.mrb[0].mxu0
    %v236 = vadd.f32 %v133, %v235
    %v237 = vpop.f32.mrb[0].mxu0
    %v238 = vadd.f32 %v137, %v237
    %239 = vmatprep.mubr.f32.mxu0 0.0
    %240 = vmatmul.mubr.f32.gmra.mrb[0].mxu0 %v77
    %v241 = vpop.f32.mrb[0].mxu0
    %v242 = vadd.f32 %v133, %v241
    %v243 = vpop.f32.mrb[0].mxu0
    %v244 = vadd.f32 %v137, %v243
    %245 = vmatprep.mubr.f32.mxu0 0.0
    %246 = vmatmul.mubr.f32.gmra.mrb[0].mxu0 %v78
    %v247 = vpop.f32.mrb[0].mxu0
    %v248 = vadd.f32 %v133, %v247
    %v249 = vpop.f32.mrb[0].mxu0
    %v250 = vadd.f32 %v137, %v249
    %251 = vmatprep.mubr.f32.mxu0 0.0
    %252 = vmatmul.mubr.f32.gmra.mrb[0].mxu0 %v79
    %v253 = vpop.f32.mrb[0].mxu0
    %v254 = vadd.f32 %v133, %v253
    %v255 = vpop.f32.mrb[0].mxu0
    %v256 = vadd.f32 %v137, %v255
    %257 = vdwg.mxu0
    %258 = vmatprep.subr.mxu0 0.0
    %259 = vmatpush1.msra.mxu0 %v82
    %260 = vmatprep.subr.mxu0 0.0
    %261 = vmatpush1.msra.mxu0 %v85
    %262 = vmatprep.subr.mxu0 0.0
    %263 = vmatpush1.msra.mxu0 %v88
    %264 = vmatprep.subr.mxu0 0.0
    %265 = vmatpush1.msra.mxu0 %v91
    %266 = vmatprep.subr.mxu0 0.0
    %267 = vmatpush1.msra.mxu0 %v94
    %268 = vmatprep.subr.mxu0 0.0
    %269 = vmatpush1.msra.mxu0 %v97
    %270 = vmatprep.subr.mxu0 0.0
    %271 = vmatpush1.msra.mxu0 %v100
    %272 = vmatprep.subr.mxu0 0.0
    %273 = vmatpush1.msra.mxu0 %v103
    %274 = vmatprep.subr.mxu0 0.0
    %275 = vmatpush1.msra.mxu0 %v106
    %276 = vmatprep.subr.mxu0 0.0
    %277 = vmatpush1.msra.mxu0 %v109
    %278 = vmatprep.subr.mxu0 0.0
    %279 = vmatpush1.msra.mxu0 %v112
    %280 = vmatprep.subr.mxu0 0.0
    %281 = vmatpush1.msra.mxu0 %v115
    %282 = vmatprep.subr.mxu0 0.0
    %283 = vmatpush1.msra.mxu0 %v118
    %284 = vmatprep.subr.mxu0 0.0
    %285 = vmatpush1.msra.mxu0 %v121
    %286 = vmatprep.subr.mxu0 0.0
    %287 = vmatpush1.msra.mxu0 %v124
    %288 = vmatprep.subr.mxu0 0.0
    %289 = vmatpush1.msra.mxu0 %v127
    %290 = vmatprep.subr.mxu0 0.0
    %291 = vmatpush1.msra.mxu0 0.0
    %292 = vmatprep.subr.mxu0 0.0
    %293 = vmatpush1.msra.mxu0 0.0
    %294 = vmatprep.subr.mxu0 0.0
    %295 = vmatpush1.msra.mxu0 0.0
    %296 = vmatprep.subr.mxu0 0.0
    %297 = vmatpush1.msra.mxu0 0.0
    %298 = vmatprep.subr.mxu0 0.0
    %299 = vmatpush1.msra.mxu0 0.0
    %300 = vmatprep.subr.mxu0 0.0
    %301 = vmatpush1.msra.mxu0 0.0
    %302 = vmatprep.subr.mxu0 0.0
    %303 = vmatpush1.msra.mxu0 0.0
    %304 = vmatprep.subr.mxu0 0.0
    %305 = vmatpush1.msra.mxu0 0.0
    %306 = vmatprep.subr.mxu0 0.0
    %307 = vmatpush1.msra.mxu0 0.0
    %308 = vmatprep.subr.mxu0 0.0
    %309 = vmatpush1.msra.mxu0 0.0
    %310 = vmatprep.subr.mxu0 0.0
    %311 = vmatpush1.msra.mxu0 0.0
    %312 = vmatprep.subr.mxu0 0.0
    %313 = vmatpush1.msra.mxu0 0.0
    %314 = vmatprep.subr.mxu0 0.0
    %315 = vmatpush1.msra.mxu0 0.0
    %316 = vmatprep.subr.mxu0 0.0
    %317 = vmatpush1.msra.mxu0 0.0
    %318 = vmatprep.subr.mxu0 0.0
    %319 = vmatpush1.msra.mxu0 0.0
    %320 = vmatprep.subr.mxu0 0.0
    %321 = vmatpush1.msra.mxu0 0.0
    %322 = vmatprep.mubr.f32.mxu0 0.0
    %323 = vmatmul.mubr.f32.gmra.mrb[0].mxu0 %v72
    %v324 = vpop.f32.mrb[0].mxu0
    %v325 = vadd.f32 %v141, %v324
    %v326 = vpop.f32.mrb[0].mxu0
    %327 = vmatprep.mubr.f32.mxu0 0.0
    %328 = vmatmul.mubr.f32.gmra.mrb[0].mxu0 %v73
    %v329 = vpop.f32.mrb[0].mxu0
    %v330 = vadd.f32 %v141, %v329
    %v331 = vpop.f32.mrb[0].mxu0
    %332 = vmatprep.mubr.f32.mxu0 0.0
    %333 = vmatmul.mubr.f32.gmra.mrb[0].mxu0 %v74
    %v334 = vpop.f32.mrb[0].mxu0
    %v335 = vadd.f32 %v141, %v334
    %v336 = vpop.f32.mrb[0].mxu0
    %337 = vmatprep.mubr.f32.mxu0 0.0
    %338 = vmatmul.mubr.f32.gmra.mrb[0].mxu0 %v75
    %v339 = vpop.f32.mrb[0].mxu0
    %v340 = vadd.f32 %v141, %v339
    %v341 = vpop.f32.mrb[0].mxu0
    %342 = vmatprep.mubr.f32.mxu0 0.0
    %343 = vmatmul.mubr.f32.gmra.mrb[0].mxu0 %v76
    %v344 = vpop.f32.mrb[0].mxu0
    %v345 = vadd.f32 %v141, %v344
    %v346 = vpop.f32.mrb[0].mxu0
    %347 = vmatprep.mubr.f32.mxu0 0.0
    %348 = vmatmul.mubr.f32.gmra.mrb[0].mxu0 %v77
    %v349 = vpop.f32.mrb[0].mxu0
    %v350 = vadd.f32 %v141, %v349
    %v351 = vpop.f32.mrb[0].mxu0
    %352 = vmatprep.mubr.f32.mxu0 0.0
    %353 = vmatmul.mubr.f32.gmra.mrb[0].mxu0 %v78
    %v354 = vpop.f32.mrb[0].mxu0
    %v355 = vadd.f32 %v141, %v354
    %v356 = vpop.f32.mrb[0].mxu0
    %357 = vmatprep.mubr.f32.mxu0 0.0
    %358 = vmatmul.mubr.f32.gmra.mrb[0].mxu0 %v79
    %v359 = vpop.f32.mrb[0].mxu0
    %v360 = vadd.f32 %v141, %v359
    %v361 = vpop.f32.mrb[0].mxu0
    %362 = vdwg.mxu0
    %363 = vst [vmem:[#allocation2] sm:$0xff] %v212
    %364 = vst [vmem:[#allocation2 + $0x8] sm:$0xff] %v214
    %365 = vst [vmem:[#allocation2 + $0x10] sm:$0xff] %v325
    %366 = vst [vmem:[#allocation2 + $0x18] sm:$0xff] %v218
    %367 = vst [vmem:[#allocation2 + $0x20] sm:$0xff] %v220
    %368 = vst [vmem:[#allocation2 + $0x28] sm:$0xff] %v330
    %369 = vst [vmem:[#allocation2 + $0x30] sm:$0xff] %v224
    %370 = vst [vmem:[#allocation2 + $0x38] sm:$0xff] %v226
    %371 = vst [vmem:[#allocation2 + $0x40] sm:$0xff] %v335
    %372 = vst [vmem:[#allocation2 + $0x48] sm:$0xff] %v230
    %373 = vst [vmem:[#allocation2 + $0x50] sm:$0xff] %v232
    %374 = vst [vmem:[#allocation2 + $0x58] sm:$0xff] %v340
    %375 = vst [vmem:[#allocation2 + $0x60] sm:$0xff] %v236
    %376 = vst [vmem:[#allocation2 + $0x68] sm:$0xff] %v238
    %377 = vst [vmem:[#allocation2 + $0x70] sm:$0xff] %v345
    %378 = vst [vmem:[#allocation2 + $0x78] sm:$0xff] %v242
    %379 = vst [vmem:[#allocation2 + $0x80] sm:$0xff] %v244
    %380 = vst [vmem:[#allocation2 + $0x88] sm:$0xff] %v350
    %381 = vst [vmem:[#allocation2 + $0x90] sm:$0xff] %v248
    %382 = vst [vmem:[#allocation2 + $0x98] sm:$0xff] %v250
    %383 = vst [vmem:[#allocation2 + $0xa0] sm:$0xff] %v355
    %384 = vst [vmem:[#allocation2 + $0xa8] sm:$0xff] %v254
    %385 = vst [vmem:[#allocation2 + $0xb0] sm:$0xff] %v256
    %386 = vst [vmem:[#allocation2 + $0xb8] sm:$0xff] %v360
    %v387 = vld [vmem:[#allocation6] sm:$0xff]
    %v388 = vld [vmem:[#allocation6 + $0x8] sm:$0xff]
    %v389 = vld [vmem:[#allocation6 + $0x10] sm:$0xff]
    %v390 = vld [vmem:[#allocation6 + $0x18] sm:$0xff]
    %v391 = vld [vmem:[#allocation6 + $0x20] sm:$0xff]
    %v392 = vld [vmem:[#allocation6 + $0x28] sm:$0xff]
    %v393 = vld [vmem:[#allocation6 + $0x30] sm:$0xff]
    %v394 = vld [vmem:[#allocation6 + $0x38] sm:$0xff]
    %v395 = vld [vmem:[#allocation6 + $0x40] sm:$0xff]
    %v396 = vld [vmem:[#allocation6 + $0x48] sm:$0xff]
    %v397 = vld [vmem:[#allocation6 + $0x50] sm:$0xff]
    %v398 = vld [vmem:[#allocation6 + $0x58] sm:$0xff]
    %v399 = vld [vmem:[#allocation6 + $0x60] sm:$0xff]
    %v400 = vld [vmem:[#allocation6 + $0x68] sm:$0xff]
    %v401 = vld [vmem:[#allocation6 + $0x70] sm:$0xff]
    %v402 = vld [vmem:[#allocation6 + $0x78] sm:$0xff]
    %v403 = vld [vmem:[#allocation6 + $0x80] sm:$0xff]
    %v404 = vld [vmem:[#allocation6 + $0x88] sm:$0xff]
    %v405 = vld [vmem:[#allocation6 + $0x90] sm:$0xff]
    %v406 = vld [vmem:[#allocation6 + $0x98] sm:$0xff]
    %v407 = vld [vmem:[#allocation6 + $0xa0] sm:$0xff]
    %v408 = vld [vmem:[#allocation6 + $0xa8] sm:$0xff]
    %v409 = vld [vmem:[#allocation6 + $0xb0] sm:$0xff]
    %v410 = vld [vmem:[#allocation6 + $0xb8] sm:$0xff]
    %v411 = vld [vmem:[#allocation6 + $0xc0] sm:$0xff]
    %v412 = vld [vmem:[#allocation6 + $0xc8] sm:$0xff]
    %v413 = vld [vmem:[#allocation6 + $0xd0] sm:$0xff]
    %v414 = vld [vmem:[#allocation6 + $0xd8] sm:$0xff]
    %v415 = vld [vmem:[#allocation6 + $0xe0] sm:$0xff]
    %v416 = vld [vmem:[#allocation6 + $0xe8] sm:$0xff]
    %v417 = vld [vmem:[#allocation6 + $0xf0] sm:$0xff]
    %v418 = vld [vmem:[#allocation6 + $0xf8] sm:$0xff]
    %v419 = vld [vmem:[#allocation6 + $0x100] sm:$0xff]
    %v420 = vld [vmem:[#allocation6 + $0x108] sm:$0xff]
    %v421 = vld [vmem:[#allocation6 + $0x110] sm:$0xff]
    %v422 = vld [vmem:[#allocation6 + $0x118] sm:$0xff]
    %v423 = vld [vmem:[#allocation6 + $0x120] sm:$0xff]
    %v424 = vld [vmem:[#allocation6 + $0x128] sm:$0xff]
    %v425 = vld [vmem:[#allocation6 + $0x130] sm:$0xff]
    %v426 = vld [vmem:[#allocation6 + $0x138] sm:$0xff]
    %v427 = vld [vmem:[#allocation6 + $0x140] sm:$0xff]
    %v428 = vld [vmem:[#allocation6 + $0x148] sm:$0xff]
    %v429 = vld [vmem:[#allocation6 + $0x150] sm:$0xff]
    %v430 = vld [vmem:[#allocation6 + $0x158] sm:$0xff]
    %v431 = vld [vmem:[#allocation6 + $0x160] sm:$0xff]
    %v432 = vld [vmem:[#allocation6 + $0x168] sm:$0xff]
    %v433 = vld [vmem:[#allocation6 + $0x170] sm:$0xff]
    %v434 = vld [vmem:[#allocation6 + $0x178] sm:$0xff]
    %v435 = vld [vmem:[%s4] sm:$0x1]
    %v437 = vlaneseq
    %v438 = vshrl.u32 %v437, 7
    %v439 = vsub.s32 0, %v438
    %v440 = vrot.slane %v435, %v439
    %v442 = vld [vmem:[#allocation3] sm:$0xff]
    %v443 = vld [vmem:[#allocation2] sm:$0xff]
    %v444 = vld [vmem:[#allocation2 + $0x8] sm:$0xff]
    %v445 = vld [vmem:[#allocation2 + $0x10] sm:$0xff]
    %446 = vmatprep.subr.mxu0 %v388
    %447 = vmatpush1.msra.mxu0 %v387
    %448 = vmatprep.subr.mxu0 %v391
    %449 = vmatpush1.msra.mxu0 %v390
    %450 = vmatprep.subr.mxu0 %v394
    %451 = vmatpush1.msra.mxu0 %v393
    %452 = vmatprep.subr.mxu0 %v397
    %453 = vmatpush1.msra.mxu0 %v396
    %454 = vmatprep.subr.mxu0 %v400
    %455 = vmatpush1.msra.mxu0 %v399
    %456 = vmatprep.subr.mxu0 %v403
    %457 = vmatpush1.msra.mxu0 %v402
    %458 = vmatprep.subr.mxu0 %v406
    %459 = vmatpush1.msra.mxu0 %v405
    %460 = vmatprep.subr.mxu0 %v409
    %461 = vmatpush1.msra.mxu0 %v408
    %462 = vmatprep.subr.mxu0 %v412
    %463 = vmatpush1.msra.mxu0 %v411
    %464 = vmatprep.subr.mxu0 %v415
    %465 = vmatpush1.msra.mxu0 %v414
    %466 = vmatprep.subr.mxu0 %v418
    %467 = vmatpush1.msra.mxu0 %v417
    %468 = vmatprep.subr.mxu0 %v421
    %469 = vmatpush1.msra.mxu0 %v420
    %470 = vmatprep.subr.mxu0 %v424
    %471 = vmatpush1.msra.mxu0 %v423
    %472 = vmatprep.subr.mxu0 %v427
    %473 = vmatpush1.msra.mxu0 %v426
    %474 = vmatprep.subr.mxu0 %v430
    %475 = vmatpush1.msra.mxu0 %v429
    %476 = vmatprep.subr.mxu0 %v433
    %477 = vmatpush1.msra.mxu0 %v432
    %478 = vmatprep.subr.mxu0 0.0
    %479 = vmatpush1.msra.mxu0 0.0
    %480 = vmatprep.subr.mxu0 0.0
    %481 = vmatpush1.msra.mxu0 0.0
    %482 = vmatprep.subr.mxu0 0.0
    %483 = vmatpush1.msra.mxu0 0.0
    %484 = vmatprep.subr.mxu0 0.0
    %485 = vmatpush1.msra.mxu0 0.0
    %486 = vmatprep.subr.mxu0 0.0
    %487 = vmatpush1.msra.mxu0 0.0
    %488 = vmatprep.subr.mxu0 0.0
    %489 = vmatpush1.msra.mxu0 0.0
    %490 = vmatprep.subr.mxu0 0.0
    %491 = vmatpush1.msra.mxu0 0.0
    %492 = vmatprep.subr.mxu0 0.0
    %493 = vmatpush1.msra.mxu0 0.0
    %494 = vmatprep.subr.mxu0 0.0
    %495 = vmatpush1.msra.mxu0 0.0
    %496 = vmatprep.subr.mxu0 0.0
    %497 = vmatpush1.msra.mxu0 0.0
    %498 = vmatprep.subr.mxu0 0.0
    %499 = vmatpush1.msra.mxu0 0.0
    %500 = vmatprep.subr.mxu0 0.0
    %501 = vmatpush1.msra.mxu0 0.0
    %502 = vmatprep.subr.mxu0 0.0
    %503 = vmatpush1.msra.mxu0 0.0
    %504 = vmatprep.subr.mxu0 0.0
    %505 = vmatpush1.msra.mxu0 0.0
    %506 = vmatprep.subr.mxu0 0.0
    %507 = vmatpush1.msra.mxu0 0.0
    %508 = vmatprep.subr.mxu0 0.0
    %509 = vmatpush1.msra.mxu0 0.0
    %510 = vmatprep.mubr.f32.mxu0 0.0
    %511 = vmatmul.mubr.f32.gmra.mrb[0].mxu0 %v442
    %v512 = vpop.f32.mrb[0].mxu0
    %v513 = vadd.f32 0.0, %v512
    %v514 = vpop.f32.mrb[0].mxu0
    %v515 = vadd.f32 0.0, %v514
    %516 = vdwg.mxu0
    %517 = vmatprep.subr.mxu0 0.0
    %518 = vmatpush1.msra.mxu0 %v389
    %519 = vmatprep.subr.mxu0 0.0
    %520 = vmatpush1.msra.mxu0 %v392
    %521 = vmatprep.subr.mxu0 0.0
    %522 = vmatpush1.msra.mxu0 %v395
    %523 = vmatprep.subr.mxu0 0.0
    %524 = vmatpush1.msra.mxu0 %v398
    %525 = vmatprep.subr.mxu0 0.0
    %526 = vmatpush1.msra.mxu0 %v401
    %527 = vmatprep.subr.mxu0 0.0
    %528 = vmatpush1.msra.mxu0 %v404
    %529 = vmatprep.subr.mxu0 0.0
    %530 = vmatpush1.msra.mxu0 %v407
    %531 = vmatprep.subr.mxu0 0.0
    %532 = vmatpush1.msra.mxu0 %v410
    %533 = vmatprep.subr.mxu0 0.0
    %534 = vmatpush1.msra.mxu0 %v413
    %535 = vmatprep.subr.mxu0 0.0
    %536 = vmatpush1.msra.mxu0 %v416
    %537 = vmatprep.subr.mxu0 0.0
    %538 = vmatpush1.msra.mxu0 %v419
    %539 = vmatprep.subr.mxu0 0.0
    %540 = vmatpush1.msra.mxu0 %v422
    %541 = vmatprep.subr.mxu0 0.0
    %542 = vmatpush1.msra.mxu0 %v425
    %543 = vmatprep.subr.mxu0 0.0
    %544 = vmatpush1.msra.mxu0 %v428
    %545 = vmatprep.subr.mxu0 0.0
    %546 = vmatpush1.msra.mxu0 %v431
    %547 = vmatprep.subr.mxu0 0.0
    %548 = vmatpush1.msra.mxu0 %v434
    %549 = vmatprep.subr.mxu0 0.0
    %550 = vmatpush1.msra.mxu0 0.0
    %551 = vmatprep.subr.mxu0 0.0
    %552 = vmatpush1.msra.mxu0 0.0
    %553 = vmatprep.subr.mxu0 0.0
    %554 = vmatpush1.msra.mxu0 0.0
    %555 = vmatprep.subr.mxu0 0.0
    %556 = vmatpush1.msra.mxu0 0.0
    %557 = vmatprep.subr.mxu0 0.0
    %558 = vmatpush1.msra.mxu0 0.0
    %559 = vmatprep.subr.mxu0 0.0
    %560 = vmatpush1.msra.mxu0 0.0
    %561 = vmatprep.subr.mxu0 0.0
    %562 = vmatpush1.msra.mxu0 0.0
    %563 = vmatprep.subr.mxu0 0.0
    %564 = vmatpush1.msra.mxu0 0.0
    %565 = vmatprep.subr.mxu0 0.0
    %566 = vmatpush1.msra.mxu0 0.0
    %567 = vmatprep.subr.mxu0 0.0
    %568 = vmatpush1.msra.mxu0 0.0
    %569 = vmatprep.subr.mxu0 0.0
    %570 = vmatpush1.msra.mxu0 0.0
    %571 = vmatprep.subr.mxu0 0.0
    %572 = vmatpush1.msra.mxu0 0.0
    %573 = vmatprep.subr.mxu0 0.0
    %574 = vmatpush1.msra.mxu0 0.0
    %575 = vmatprep.subr.mxu0 0.0
    %576 = vmatpush1.msra.mxu0 0.0
    %577 = vmatprep.subr.mxu0 0.0
    %578 = vmatpush1.msra.mxu0 0.0
    %579 = vmatprep.subr.mxu0 0.0
    %580 = vmatpush1.msra.mxu0 0.0
    %581 = vmatprep.mubr.f32.mxu0 0.0
    %582 = vmatmul.mubr.f32.gmra.mrb[0].mxu0 %v442
    %v583 = vpop.f32.mrb[0].mxu0
    %v584 = vadd.f32 0.0, %v583
    %v585 = vpop.f32.mrb[0].mxu0
    %586 = vdwg.mxu0
    %v587 = vadd.f32 %v443, %v513
    %v588 = vadd.f32 %v444, %v515
    %v589 = vxor.u32 %v587, 2147483648
    %v590 = vxor.u32 %v588, 2147483648
    %v591 = vmul.f32 %v589, 1.442695
    %v592 = vpow.pop %v591
    %v593 = vmul.f32 %v590, 1.442695
    %v594 = vpow.pop %v593
    %v595 = vadd.f32 %v592, 1.0
    %v596 = vadd.f32 %v594, 1.0
    %v597 = vrcp.pop %v595
    %v598 = vmul.f32 1.0, %v597
    %v599 = vrcp.pop %v596
    %v600 = vmul.f32 1.0, %v599
    %v601 = vadd.f32 %v584, %v440
    %v602 = vmul.f32 %v598, %v601
    %v603 = vadd.f32 %v445, %v602
    %v604 = vtanh.pop %v603
    %v605 = vsub.f32 1.0, %v600
    %v606 = vmul.f32 %v605, %v604
    %v607 = vmul.f32 %v600, %v442
    %v608 = vadd.f32 %v606, %v607
    %s609 = scalar_lea.vmem [#allocation2], 24
    %v610 = vld [vmem:[%s609] sm:$0xff]
    %v611 = vld [vmem:[%s609 + $0x8] sm:$0xff]
    %v612 = vld [vmem:[%s609 + $0x10] sm:$0xff]
    %613 = vmatprep.subr.mxu0 %v388
    %614 = vmatpush1.msra.mxu0 %v387
    %615 = vmatprep.subr.mxu0 %v391
    %616 = vmatpush1.msra.mxu0 %v390
    %617 = vmatprep.subr.mxu0 %v394
    %618 = vmatpush1.msra.mxu0 %v393
    %619 = vmatprep.subr.mxu0 %v397
    %620 = vmatpush1.msra.mxu0 %v396
    %621 = vmatprep.subr.mxu0 %v400
    %622 = vmatpush1.msra.mxu0 %v399
    %623 = vmatprep.subr.mxu0 %v403
    %624 = vmatpush1.msra.mxu0 %v402
    %625 = vmatprep.subr.mxu0 %v406
    %626 = vmatpush1.msra.mxu0 %v405
    %627 = vmatprep.subr.mxu0 %v409
    %628 = vmatpush1.msra.mxu0 %v408
    %629 = vmatprep.subr.mxu0 %v412
    %630 = vmatpush1.msra.mxu0 %v411
    %631 = vmatprep.subr.mxu0 %v415
    %632 = vmatpush1.msra.mxu0 %v414
    %633 = vmatprep.subr.mxu0 %v418
    %634 = vmatpush1.msra.mxu0 %v417
    %635 = vmatprep.subr.mxu0 %v421
    %636 = vmatpush1.msra.mxu0 %v420
    %637 = vmatprep.subr.mxu0 %v424
    %638 = vmatpush1.msra.mxu0 %v423
    %639 = vmatprep.subr.mxu0 %v427
    %640 = vmatpush1.msra.mxu0 %v426
    %641 = vmatprep.subr.mxu0 %v430
    %642 = vmatpush1.msra.mxu0 %v429
    %643 = vmatprep.subr.mxu0 %v433
    %644 = vmatpush1.msra.mxu0 %v432
    %645 = vmatprep.subr.mxu0 0.0
    %646 = vmatpush1.msra.mxu0 0.0
    %647 = vmatprep.subr.mxu0 0.0
    %648 = vmatpush1.msra.mxu0 0.0
    %649 = vmatprep.subr.mxu0 0.0
    %650 = vmatpush1.msra.mxu0 0.0
    %651 = vmatprep.subr.mxu0 0.0
    %652 = vmatpush1.msra.mxu0 0.0
    %653 = vmatprep.subr.mxu0 0.0
    %654 = vmatpush1.msra.mxu0 0.0
    %655 = vmatprep.subr.mxu0 0.0
    %656 = vmatpush1.msra.mxu0 0.0
    %657 = vmatprep.subr.mxu0 0.0
    %658 = vmatpush1.msra.mxu0 0.0
    %659 = vmatprep.subr.mxu0 0.0
    %660 = vmatpush1.msra.mxu0 0.0
    %661 = vmatprep.subr.mxu0 0.0
    %662 = vmatpush1.msra.mxu0 0.0
    %663 = vmatprep.subr.mxu0 0.0
    %664 = vmatpush1.msra.mxu0 0.0
    %665 = vmatprep.subr.mxu0 0.0
    %666 = vmatpush1.msra.mxu0 0.0
    %667 = vmatprep.subr.mxu0 0.0
    %668 = vmatpush1.msra.mxu0 0.0
    %669 = vmatprep.subr.mxu0 0.0
    %670 = vmatpush1.msra.mxu0 0.0
    %671 = vmatprep.subr.mxu0 0.0
    %672 = vmatpush1.msra.mxu0 0.0
    %673 = vmatprep.subr.mxu0 0.0
    %674 = vmatpush1.msra.mxu0 0.0
    %675 = vmatprep.subr.mxu0 0.0
    %676 = vmatpush1.msra.mxu0 0.0
    %677 = vmatprep.mubr.f32.mxu0 0.0
    %678 = vmatmul.mubr.f32.gmra.mrb[0].mxu0 %v608
    %v679 = vpop.f32.mrb[0].mxu0
    %v680 = vadd.f32 0.0, %v679
    %v681 = vpop.f32.mrb[0].mxu0
    %v682 = vadd.f32 0.0, %v681
    %683 = vdwg.mxu0
    %684 = vmatprep.subr.mxu0 0.0
    %685 = vmatpush1.msra.mxu0 %v389
    %686 = vmatprep.subr.mxu0 0.0
    %687 = vmatpush1.msra.mxu0 %v392
    %688 = vmatprep.subr.mxu0 0.0
    %689 = vmatpush1.msra.mxu0 %v395
    %690 = vmatprep.subr.mxu0 0.0
    %691 = vmatpush1.msra.mxu0 %v398
    %692 = vmatprep.subr.mxu0 0.0
    %693 = vmatpush1.msra.mxu0 %v401
    %694 = vmatprep.subr.mxu0 0.0
    %695 = vmatpush1.msra.mxu0 %v404
    %696 = vmatprep.subr.mxu0 0.0
    %697 = vmatpush1.msra.mxu0 %v407
    %698 = vmatprep.subr.mxu0 0.0
    %699 = vmatpush1.msra.mxu0 %v410
    %700 = vmatprep.subr.mxu0 0.0
    %701 = vmatpush1.msra.mxu0 %v413
    %702 = vmatprep.subr.mxu0 0.0
    %703 = vmatpush1.msra.mxu0 %v416
    %704 = vmatprep.subr.mxu0 0.0
    %705 = vmatpush1.msra.mxu0 %v419
    %706 = vmatprep.subr.mxu0 0.0
    %707 = vmatpush1.msra.mxu0 %v422
    %708 = vmatprep.subr.mxu0 0.0
    %709 = vmatpush1.msra.mxu0 %v425
    %710 = vmatprep.subr.mxu0 0.0
    %711 = vmatpush1.msra.mxu0 %v428
    %712 = vmatprep.subr.mxu0 0.0
    %713 = vmatpush1.msra.mxu0 %v431
    %714 = vmatprep.subr.mxu0 0.0
    %715 = vmatpush1.msra.mxu0 %v434
    %716 = vmatprep.subr.mxu0 0.0
    %717 = vmatpush1.msra.mxu0 0.0
    %718 = vmatprep.subr.mxu0 0.0
    %719 = vmatpush1.msra.mxu0 0.0
    %720 = vmatprep.subr.mxu0 0.0
    %721 = vmatpush1.msra.mxu0 0.0
    %722 = vmatprep.subr.mxu0 0.0
    %723 = vmatpush1.msra.mxu0 0.0
    %724 = vmatprep.subr.mxu0 0.0
    %725 = vmatpush1.msra.mxu0 0.0
    %726 = vmatprep.subr.mxu0 0.0
    %727 = vmatpush1.msra.mxu0 0.0
    %728 = vmatprep.subr.mxu0 0.0
    %729 = vmatpush1.msra.mxu0 0.0
    %730 = vmatprep.subr.mxu0 0.0
    %731 = vmatpush1.msra.mxu0 0.0
    %732 = vmatprep.subr.mxu0 0.0
    %733 = vmatpush1.msra.mxu0 0.0
    %734 = vmatprep.subr.mxu0 0.0
    %735 = vmatpush1.msra.mxu0 0.0
    %736 = vmatprep.subr.mxu0 0.0
    %737 = vmatpush1.msra.mxu0 0.0
    %738 = vmatprep.subr.mxu0 0.0
    %739 = vmatpush1.msra.mxu0 0.0
    %740 = vmatprep.subr.mxu0 0.0
    %741 = vmatpush1.msra.mxu0 0.0
    %742 = vmatprep.subr.mxu0 0.0
    %743 = vmatpush1.msra.mxu0 0.0
    %744 = vmatprep.subr.mxu0 0.0
    %745 = vmatpush1.msra.mxu0 0.0
    %746 = vmatprep.subr.mxu0 0.0
    %747 = vmatpush1.msra.mxu0 0.0
    %748 = vmatprep.mubr.f32.mxu0 0.0
    %749 = vmatmul.mubr.f32.gmra.mrb[0].mxu0 %v608
    %v750 = vpop.f32.mrb[0].mxu0
    %v751 = vadd.f32 0.0, %v750
    %v752 = vpop.f32.mrb[0].mxu0
    %753 = vdwg.mxu0
    %v754 = vadd.f32 %v610, %v680
    %v755 = vadd.f32 %v611, %v682
    %v756 = vxor.u32 %v754, 2147483648
    %v757 = vxor.u32 %v755, 2147483648
    %v758 = vmul.f32 %v756, 1.442695
    %v759 = vpow.pop %v758
    %v760 = vmul.f32 %v757, 1.442695
    %v761 = vpow.pop %v760
    %v762 = vadd.f32 %v759, 1.0
    %v763 = vadd.f32 %v761, 1.0
    %v764 = vrcp.pop %v762
    %v765 = vmul.f32 1.0, %v764
    %v766 = vrcp.pop %v763
    %v767 = vmul.f32 1.0, %v766
    %v768 = vadd.f32 %v751, %v440
    %v769 = vmul.f32 %v765, %v768
    %v770 = vadd.f32 %v612, %v769
    %v771 = vtanh.pop %v770
    %v772 = vsub.f32 1.0, %v767
    %v773 = vmul.f32 %v772, %v771
    %v774 = vmul.f32 %v767, %v608
    %v775 = vadd.f32 %v773, %v774
    %s776 = scalar_lea.vmem [#allocation2], 48
    %v777 = vld [vmem:[%s776] sm:$0xff]
    %v778 = vld [vmem:[%s776 + $0x8] sm:$0xff]
    %v779 = vld [vmem:[%s776 + $0x10] sm:$0xff]
    %780 = vmatprep.subr.mxu0 %v388
    %781 = vmatpush1.msra.mxu0 %v387
    %782 = vmatprep.subr.mxu0 %v391
    %783 = vmatpush1.msra.mxu0 %v390
    %784 = vmatprep.subr.mxu0 %v394
    %785 = vmatpush1.msra.mxu0 %v393
    %786 = vmatprep.subr.mxu0 %v397
    %787 = vmatpush1.msra.mxu0 %v396
    %788 = vmatprep.subr.mxu0 %v400
    %789 = vmatpush1.msra.mxu0 %v399
    %790 = vmatprep.subr.mxu0 %v403
    %791 = vmatpush1.msra.mxu0 %v402
    %792 = vmatprep.subr.mxu0 %v406
    %793 = vmatpush1.msra.mxu0 %v405
    %794 = vmatprep.subr.mxu0 %v409
    %795 = vmatpush1.msra.mxu0 %v408
    %796 = vmatprep.subr.mxu0 %v412
    %797 = vmatpush1.msra.mxu0 %v411
    %798 = vmatprep.subr.mxu0 %v415
    %799 = vmatpush1.msra.mxu0 %v414
    %800 = vmatprep.subr.mxu0 %v418
    %801 = vmatpush1.msra.mxu0 %v417
    %802 = vmatprep.subr.mxu0 %v421
    %803 = vmatpush1.msra.mxu0 %v420
    %804 = vmatprep.subr.mxu0 %v424
    %805 = vmatpush1.msra.mxu0 %v423
    %806 = vmatprep.subr.mxu0 %v427
    %807 = vmatpush1.msra.mxu0 %v426
    %808 = vmatprep.subr.mxu0 %v430
    %809 = vmatpush1.msra.mxu0 %v429
    %810 = vmatprep.subr.mxu0 %v433
    %811 = vmatpush1.msra.mxu0 %v432
    %812 = vmatprep.subr.mxu0 0.0
    %813 = vmatpush1.msra.mxu0 0.0
    %814 = vmatprep.subr.mxu0 0.0
    %815 = vmatpush1.msra.mxu0 0.0
    %816 = vmatprep.subr.mxu0 0.0
    %817 = vmatpush1.msra.mxu0 0.0
    %818 = vmatprep.subr.mxu0 0.0
    %819 = vmatpush1.msra.mxu0 0.0
    %820 = vmatprep.subr.mxu0 0.0
    %821 = vmatpush1.msra.mxu0 0.0
    %822 = vmatprep.subr.mxu0 0.0
    %823 = vmatpush1.msra.mxu0 0.0
    %824 = vmatprep.subr.mxu0 0.0
    %825 = vmatpush1.msra.mxu0 0.0
    %826 = vmatprep.subr.mxu0 0.0
    %827 = vmatpush1.msra.mxu0 0.0
    %828 = vmatprep.subr.mxu0 0.0
    %829 = vmatpush1.msra.mxu0 0.0
    %830 = vmatprep.subr.mxu0 0.0
    %831 = vmatpush1.msra.mxu0 0.0
    %832 = vmatprep.subr.mxu0 0.0
    %833 = vmatpush1.msra.mxu0 0.0
    %834 = vmatprep.subr.mxu0 0.0
    %835 = vmatpush1.msra.mxu0 0.0
    %836 = vmatprep.subr.mxu0 0.0
    %837 = vmatpush1.msra.mxu0 0.0
    %838 = vmatprep.subr.mxu0 0.0
    %839 = vmatpush1.msra.mxu0 0.0
    %840 = vmatprep.subr.mxu0 0.0
    %841 = vmatpush1.msra.mxu0 0.0
    %842 = vmatprep.subr.mxu0 0.0
    %843 = vmatpush1.msra.mxu0 0.0
    %844 = vmatprep.mubr.f32.mxu0 0.0
    %845 = vmatmul.mubr.f32.gmra.mrb[0].mxu0 %v775
    %v846 = vpop.f32.mrb[0].mxu0
    %v847 = vadd.f32 0.0, %v846
    %v848 = vpop.f32.mrb[0].mxu0
    %v849 = vadd.f32 0.0, %v848
    %850 = vdwg.mxu0
    %851 = vmatprep.subr.mxu0 0.0
    %852 = vmatpush1.msra.mxu0 %v389
    %853 = vmatprep.subr.mxu0 0.0
    %854 = vmatpush1.msra.mxu0 %v392
    %855 = vmatprep.subr.mxu0 0.0
    %856 = vmatpush1.msra.mxu0 %v395
    %857 = vmatprep.subr.mxu0 0.0
    %858 = vmatpush1.msra.mxu0 %v398
    %859 = vmatprep.subr.mxu0 0.0
    %860 = vmatpush1.msra.mxu0 %v401
    %861 = vmatprep.subr.mxu0 0.0
    %862 = vmatpush1.msra.mxu0 %v404
    %863 = vmatprep.subr.mxu0 0.0
    %864 = vmatpush1.msra.mxu0 %v407
    %865 = vmatprep.subr.mxu0 0.0
    %866 = vmatpush1.msra.mxu0 %v410
    %867 = vmatprep.subr.mxu0 0.0
    %868 = vmatpush1.msra.mxu0 %v413
    %869 = vmatprep.subr.mxu0 0.0
    %870 = vmatpush1.msra.mxu0 %v416
    %871 = vmatprep.subr.mxu0 0.0
    %872 = vmatpush1.msra.mxu0 %v419
    %873 = vmatprep.subr.mxu0 0.0
    %874 = vmatpush1.msra.mxu0 %v422
    %875 = vmatprep.subr.mxu0 0.0
    %876 = vmatpush1.msra.mxu0 %v425
    %877 = vmatprep.subr.mxu0 0.0
    %878 = vmatpush1.msra.mxu0 %v428
    %879 = vmatprep.subr.mxu0 0.0
    %880 = vmatpush1.msra.mxu0 %v431
    %881 = vmatprep.subr.mxu0 0.0
    %882 = vmatpush1.msra.mxu0 %v434
    %883 = vmatprep.subr.mxu0 0.0
    %884 = vmatpush1.msra.mxu0 0.0
    %885 = vmatprep.subr.mxu0 0.0
    %886 = vmatpush1.msra.mxu0 0.0
    %887 = vmatprep.subr.mxu0 0.0
    %888 = vmatpush1.msra.mxu0 0.0
    %889 = vmatprep.subr.mxu0 0.0
    %890 = vmatpush1.msra.mxu0 0.0
    %891 = vmatprep.subr.mxu0 0.0
    %892 = vmatpush1.msra.mxu0 0.0
    %893 = vmatprep.subr.mxu0 0.0
    %894 = vmatpush1.msra.mxu0 0.0
    %895 = vmatprep.subr.mxu0 0.0
    %896 = vmatpush1.msra.mxu0 0.0
    %897 = vmatprep.subr.mxu0 0.0
    %898 = vmatpush1.msra.mxu0 0.0
    %899 = vmatprep.subr.mxu0 0.0
    %900 = vmatpush1.msra.mxu0 0.0
    %901 = vmatprep.subr.mxu0 0.0
    %902 = vmatpush1.msra.mxu0 0.0
    %903 = vmatprep.subr.mxu0 0.0
    %904 = vmatpush1.msra.mxu0 0.0
    %905 = vmatprep.subr.mxu0 0.0
    %906 = vmatpush1.msra.mxu0 0.0
    %907 = vmatprep.subr.mxu0 0.0
    %908 = vmatpush1.msra.mxu0 0.0
    %909 = vmatprep.subr.mxu0 0.0
    %910 = vmatpush1.msra.mxu0 0.0
    %911 = vmatprep.subr.mxu0 0.0
    %912 = vmatpush1.msra.mxu0 0.0
    %913 = vmatprep.subr.mxu0 0.0
    %914 = vmatpush1.msra.mxu0 0.0
    %915 = vmatprep.mubr.f32.mxu0 0.0
    %916 = vmatmul.mubr.f32.gmra.mrb[0].mxu0 %v775
    %v917 = vpop.f32.mrb[0].mxu0
    %v918 = vadd.f32 0.0, %v917
    %v919 = vpop.f32.mrb[0].mxu0
    %920 = vdwg.mxu0
    %v921 = vadd.f32 %v777, %v847
    %v922 = vadd.f32 %v778, %v849
    %v923 = vxor.u32 %v921, 2147483648
    %v924 = vxor.u32 %v922, 2147483648
    %v925 = vmul.f32 %v923, 1.442695
    %v926 = vpow.pop %v925
    %v927 = vmul.f32 %v924, 1.442695
    %v928 = vpow.pop %v927
    %v929 = vadd.f32 %v926, 1.0
    %v930 = vadd.f32 %v928, 1.0
    %v931 = vrcp.pop %v929
    %v932 = vmul.f32 1.0, %v931
    %v933 = vrcp.pop %v930
    %v934 = vmul.f32 1.0, %v933
    %v935 = vadd.f32 %v918, %v440
    %v936 = vmul.f32 %v932, %v935
    %v937 = vadd.f32 %v779, %v936
    %v938 = vtanh.pop %v937
    %v939 = vsub.f32 1.0, %v934
    %v940 = vmul.f32 %v939, %v938
    %v941 = vmul.f32 %v934, %v775
    %v942 = vadd.f32 %v940, %v941
    %s943 = scalar_lea.vmem [#allocation2], 72
    %v944 = vld [vmem:[%s943] sm:$0xff]
    %v945 = vld [vmem:[%s943 + $0x8] sm:$0xff]
    %v946 = vld [vmem:[%s943 + $0x10] sm:$0xff]
    %947 = vmatprep.subr.mxu0 %v388
    %948 = vmatpush1.msra.mxu0 %v387
    %949 = vmatprep.subr.mxu0 %v391
    %950 = vmatpush1.msra.mxu0 %v390
    %951 = vmatprep.subr.mxu0 %v394
    %952 = vmatpush1.msra.mxu0 %v393
    %953 = vmatprep.subr.mxu0 %v397
    %954 = vmatpush1.msra.mxu0 %v396
    %955 = vmatprep.subr.mxu0 %v400
    %956 = vmatpush1.msra.mxu0 %v399
    %957 = vmatprep.subr.mxu0 %v403
    %958 = vmatpush1.msra.mxu0 %v402
    %959 = vmatprep.subr.mxu0 %v406
    %960 = vmatpush1.msra.mxu0 %v405
    %961 = vmatprep.subr.mxu0 %v409
    %962 = vmatpush1.msra.mxu0 %v408
    %963 = vmatprep.subr.mxu0 %v412
    %964 = vmatpush1.msra.mxu0 %v411
    %965 = vmatprep.subr.mxu0 %v415
    %966 = vmatpush1.msra.mxu0 %v414
    %967 = vmatprep.subr.mxu0 %v418
    %968 = vmatpush1.msra.mxu0 %v417
    %969 = vmatprep.subr.mxu0 %v421
    %970 = vmatpush1.msra.mxu0 %v420
    %971 = vmatprep.subr.mxu0 %v424
    %972 = vmatpush1.msra.mxu0 %v423
    %973 = vmatprep.subr.mxu0 %v427
    %974 = vmatpush1.msra.mxu0 %v426
    %975 = vmatprep.subr.mxu0 %v430
    %976 = vmatpush1.msra.mxu0 %v429
    %977 = vmatprep.subr.mxu0 %v433
    %978 = vmatpush1.msra.mxu0 %v432
    %979 = vmatprep.subr.mxu0 0.0
    %980 = vmatpush1.msra.mxu0 0.0
    %981 = vmatprep.subr.mxu0 0.0
    %982 = vmatpush1.msra.mxu0 0.0
    %983 = vmatprep.subr.mxu0 0.0
    %984 = vmatpush1.msra.mxu0 0.0
    %985 = vmatprep.subr.mxu0 0.0
    %986 = vmatpush1.msra.mxu0 0.0
    %987 = vmatprep.subr.mxu0 0.0
    %988 = vmatpush1.msra.mxu0 0.0
    %989 = vmatprep.subr.mxu0 0.0
    %990 = vmatpush1.msra.mxu0 0.0
    %991 = vmatprep.subr.mxu0 0.0
    %992 = vmatpush1.msra.mxu0 0.0
    %993 = vmatprep.subr.mxu0 0.0
    %994 = vmatpush1.msra.mxu0 0.0
    %995 = vmatprep.subr.mxu0 0.0
    %996 = vmatpush1.msra.mxu0 0.0
    %997 = vmatprep.subr.mxu0 0.0
    %998 = vmatpush1.msra.mxu0 0.0
    %999 = vmatprep.subr.mxu0 0.0
    %1000 = vmatpush1.msra.mxu0 0.0
    %1001 = vmatprep.subr.mxu0 0.0
    %1002 = vmatpush1.msra.mxu0 0.0
    %1003 = vmatprep.subr.mxu0 0.0
    %1004 = vmatpush1.msra.mxu0 0.0
    %1005 = vmatprep.subr.mxu0 0.0
    %1006 = vmatpush1.msra.mxu0 0.0
    %1007 = vmatprep.subr.mxu0 0.0
    %1008 = vmatpush1.msra.mxu0 0.0
    %1009 = vmatprep.subr.mxu0 0.0
    %1010 = vmatpush1.msra.mxu0 0.0
    %1011 = vmatprep.mubr.f32.mxu0 0.0
    %1012 = vmatmul.mubr.f32.gmra.mrb[0].mxu0 %v942
    %v1013 = vpop.f32.mrb[0].mxu0
    %v1014 = vadd.f32 0.0, %v1013
    %v1015 = vpop.f32.mrb[0].mxu0
    %v1016 = vadd.f32 0.0, %v1015
    %1017 = vdwg.mxu0
    %1018 = vmatprep.subr.mxu0 0.0
    %1019 = vmatpush1.msra.mxu0 %v389
    %1020 = vmatprep.subr.mxu0 0.0
    %1021 = vmatpush1.msra.mxu0 %v392
    %1022 = vmatprep.subr.mxu0 0.0
    %1023 = vmatpush1.msra.mxu0 %v395
    %1024 = vmatprep.subr.mxu0 0.0
    %1025 = vmatpush1.msra.mxu0 %v398
    %1026 = vmatprep.subr.mxu0 0.0
    %1027 = vmatpush1.msra.mxu0 %v401
    %1028 = vmatprep.subr.mxu0 0.0
    %1029 = vmatpush1.msra.mxu0 %v404
    %1030 = vmatprep.subr.mxu0 0.0
    %1031 = vmatpush1.msra.mxu0 %v407
    %1032 = vmatprep.subr.mxu0 0.0
    %1033 = vmatpush1.msra.mxu0 %v410
    %1034 = vmatprep.subr.mxu0 0.0
    %1035 = vmatpush1.msra.mxu0 %v413
    %1036 = vmatprep.subr.mxu0 0.0
    %1037 = vmatpush1.msra.mxu0 %v416
    %1038 = vmatprep.subr.mxu0 0.0
    %1039 = vmatpush1.msra.mxu0 %v419
    %1040 = vmatprep.subr.mxu0 0.0
    %1041 = vmatpush1.msra.mxu0 %v422
    %1042 = vmatprep.subr.mxu0 0.0
    %1043 = vmatpush1.msra.mxu0 %v425
    %1044 = vmatprep.subr.mxu0 0.0
    %1045 = vmatpush1.msra.mxu0 %v428
    %1046 = vmatprep.subr.mxu0 0.0
    %1047 = vmatpush1.msra.mxu0 %v431
    %1048 = vmatprep.subr.mxu0 0.0
    %1049 = vmatpush1.msra.mxu0 %v434
    %1050 = vmatprep.subr.mxu0 0.0
    %1051 = vmatpush1.msra.mxu0 0.0
    %1052 = vmatprep.subr.mxu0 0.0
    %1053 = vmatpush1.msra.mxu0 0.0
    %1054 = vmatprep.subr.mxu0 0.0
    %1055 = vmatpush1.msra.mxu0 0.0
    %1056 = vmatprep.subr.mxu0 0.0
    %1057 = vmatpush1.msra.mxu0 0.0
    %1058 = vmatprep.subr.mxu0 0.0
    %1059 = vmatpush1.msra.mxu0 0.0
    %1060 = vmatprep.subr.mxu0 0.0
    %1061 = vmatpush1.msra.mxu0 0.0
    %1062 = vmatprep.subr.mxu0 0.0
    %1063 = vmatpush1.msra.mxu0 0.0
    %1064 = vmatprep.subr.mxu0 0.0
    %1065 = vmatpush1.msra.mxu0 0.0
    %1066 = vmatprep.subr.mxu0 0.0
    %1067 = vmatpush1.msra.mxu0 0.0
    %1068 = vmatprep.subr.mxu0 0.0
    %1069 = vmatpush1.msra.mxu0 0.0
    %1070 = vmatprep.subr.mxu0 0.0
    %1071 = vmatpush1.msra.mxu0 0.0
    %1072 = vmatprep.subr.mxu0 0.0
    %1073 = vmatpush1.msra.mxu0 0.0
    %1074 = vmatprep.subr.mxu0 0.0
    %1075 = vmatpush1.msra.mxu0 0.0
    %1076 = vmatprep.subr.mxu0 0.0
    %1077 = vmatpush1.msra.mxu0 0.0
    %1078 = vmatprep.subr.mxu0 0.0
    %1079 = vmatpush1.msra.mxu0 0.0
    %1080 = vmatprep.subr.mxu0 0.0
    %1081 = vmatpush1.msra.mxu0 0.0
    %1082 = vmatprep.mubr.f32.mxu0 0.0
    %1083 = vmatmul.mubr.f32.gmra.mrb[0].mxu0 %v942
    %v1084 = vpop.f32.mrb[0].mxu0
    %v1085 = vadd.f32 0.0, %v1084
    %v1086 = vpop.f32.mrb[0].mxu0
    %1087 = vdwg.mxu0
    %v1088 = vadd.f32 %v944, %v1014
    %v1089 = vadd.f32 %v945, %v1016
    %v1090 = vxor.u32 %v1088, 2147483648
    %v1091 = vxor.u32 %v1089, 2147483648
    %v1092 = vmul.f32 %v1090, 1.442695
    %v1093 = vpow.pop %v1092
    %v1094 = vmul.f32 %v1091, 1.442695
    %v1095 = vpow.pop %v1094
    %v1096 = vadd.f32 %v1093, 1.0
    %v1097 = vadd.f32 %v1095, 1.0
    %v1098 = vrcp.pop %v1096
    %v1099 = vmul.f32 1.0, %v1098
    %v1100 = vrcp.pop %v1097
    %v1101 = vmul.f32 1.0, %v1100
    %v1102 = vadd.f32 %v1085, %v440
    %v1103 = vmul.f32 %v1099, %v1102
    %v1104 = vadd.f32 %v946, %v1103
    %v1105 = vtanh.pop %v1104
    %v1106 = vsub.f32 1.0, %v1101
    %v1107 = vmul.f32 %v1106, %v1105
    %v1108 = vmul.f32 %v1101, %v942
    %v1109 = vadd.f32 %v1107, %v1108
    %s1110 = scalar_lea.vmem [#allocation2], 96
    %v1111 = vld [vmem:[%s1110] sm:$0xff]
    %v1112 = vld [vmem:[%s1110 + $0x8] sm:$0xff]
    %v1113 = vld [vmem:[%s1110 + $0x10] sm:$0xff]
    %1114 = vmatprep.subr.mxu0 %v388
    %1115 = vmatpush1.msra.mxu0 %v387
    %1116 = vmatprep.subr.mxu0 %v391
    %1117 = vmatpush1.msra.mxu0 %v390
    %1118 = vmatprep.subr.mxu0 %v394
    %1119 = vmatpush1.msra.mxu0 %v393
    %1120 = vmatprep.subr.mxu0 %v397
    %1121 = vmatpush1.msra.mxu0 %v396
    %1122 = vmatprep.subr.mxu0 %v400
    %1123 = vmatpush1.msra.mxu0 %v399
    %1124 = vmatprep.subr.mxu0 %v403
    %1125 = vmatpush1.msra.mxu0 %v402
    %1126 = vmatprep.subr.mxu0 %v406
    %1127 = vmatpush1.msra.mxu0 %v405
    %1128 = vmatprep.subr.mxu0 %v409
    %1129 = vmatpush1.msra.mxu0 %v408
    %1130 = vmatprep.subr.mxu0 %v412
    %1131 = vmatpush1.msra.mxu0 %v411
    %1132 = vmatprep.subr.mxu0 %v415
    %1133 = vmatpush1.msra.mxu0 %v414
    %1134 = vmatprep.subr.mxu0 %v418
    %1135 = vmatpush1.msra.mxu0 %v417
    %1136 = vmatprep.subr.mxu0 %v421
    %1137 = vmatpush1.msra.mxu0 %v420
    %1138 = vmatprep.subr.mxu0 %v424
    %1139 = vmatpush1.msra.mxu0 %v423
    %1140 = vmatprep.subr.mxu0 %v427
    %1141 = vmatpush1.msra.mxu0 %v426
    %1142 = vmatprep.subr.mxu0 %v430
    %1143 = vmatpush1.msra.mxu0 %v429
    %1144 = vmatprep.subr.mxu0 %v433
    %1145 = vmatpush1.msra.mxu0 %v432
    %1146 = vmatprep.subr.mxu0 0.0
    %1147 = vmatpush1.msra.mxu0 0.0
    %1148 = vmatprep.subr.mxu0 0.0
    %1149 = vmatpush1.msra.mxu0 0.0
    %1150 = vmatprep.subr.mxu0 0.0
    %1151 = vmatpush1.msra.mxu0 0.0
    %1152 = vmatprep.subr.mxu0 0.0
    %1153 = vmatpush1.msra.mxu0 0.0
    %1154 = vmatprep.subr.mxu0 0.0
    %1155 = vmatpush1.msra.mxu0 0.0
    %1156 = vmatprep.subr.mxu0 0.0
    %1157 = vmatpush1.msra.mxu0 0.0
    %1158 = vmatprep.subr.mxu0 0.0
    %1159 = vmatpush1.msra.mxu0 0.0
    %1160 = vmatprep.subr.mxu0 0.0
    %1161 = vmatpush1.msra.mxu0 0.0
    %1162 = vmatprep.subr.mxu0 0.0
    %1163 = vmatpush1.msra.mxu0 0.0
    %1164 = vmatprep.subr.mxu0 0.0
    %1165 = vmatpush1.msra.mxu0 0.0
    %1166 = vmatprep.subr.mxu0 0.0
    %1167 = vmatpush1.msra.mxu0 0.0
    %1168 = vmatprep.subr.mxu0 0.0
    %1169 = vmatpush1.msra.mxu0 0.0
    %1170 = vmatprep.subr.mxu0 0.0
    %1171 = vmatpush1.msra.mxu0 0.0
    %1172 = vmatprep.subr.mxu0 0.0
    %1173 = vmatpush1.msra.mxu0 0.0
    %1174 = vmatprep.subr.mxu0 0.0
    %1175 = vmatpush1.msra.mxu0 0.0
    %1176 = vmatprep.subr.mxu0 0.0
    %1177 = vmatpush1.msra.mxu0 0.0
    %1178 = vmatprep.mubr.f32.mxu0 0.0
    %1179 = vmatmul.mubr.f32.gmra.mrb[0].mxu0 %v1109
    %v1180 = vpop.f32.mrb[0].mxu0
    %v1181 = vadd.f32 0.0, %v1180
    %v1182 = vpop.f32.mrb[0].mxu0
    %v1183 = vadd.f32 0.0, %v1182
    %1184 = vdwg.mxu0
    %1185 = vmatprep.subr.mxu0 0.0
    %1186 = vmatpush1.msra.mxu0 %v389
    %1187 = vmatprep.subr.mxu0 0.0
    %1188 = vmatpush1.msra.mxu0 %v392
    %1189 = vmatprep.subr.mxu0 0.0
    %1190 = vmatpush1.msra.mxu0 %v395
    %1191 = vmatprep.subr.mxu0 0.0
    %1192 = vmatpush1.msra.mxu0 %v398
    %1193 = vmatprep.subr.mxu0 0.0
    %1194 = vmatpush1.msra.mxu0 %v401
    %1195 = vmatprep.subr.mxu0 0.0
    %1196 = vmatpush1.msra.mxu0 %v404
    %1197 = vmatprep.subr.mxu0 0.0
    %1198 = vmatpush1.msra.mxu0 %v407
    %1199 = vmatprep.subr.mxu0 0.0
    %1200 = vmatpush1.msra.mxu0 %v410
    %1201 = vmatprep.subr.mxu0 0.0
    %1202 = vmatpush1.msra.mxu0 %v413
    %1203 = vmatprep.subr.mxu0 0.0
    %1204 = vmatpush1.msra.mxu0 %v416
    %1205 = vmatprep.subr.mxu0 0.0
    %1206 = vmatpush1.msra.mxu0 %v419
    %1207 = vmatprep.subr.mxu0 0.0
    %1208 = vmatpush1.msra.mxu0 %v422
    %1209 = vmatprep.subr.mxu0 0.0
    %1210 = vmatpush1.msra.mxu0 %v425
    %1211 = vmatprep.subr.mxu0 0.0
    %1212 = vmatpush1.msra.mxu0 %v428
    %1213 = vmatprep.subr.mxu0 0.0
    %1214 = vmatpush1.msra.mxu0 %v431
    %1215 = vmatprep.subr.mxu0 0.0
    %1216 = vmatpush1.msra.mxu0 %v434
    %1217 = vmatprep.subr.mxu0 0.0
    %1218 = vmatpush1.msra.mxu0 0.0
    %1219 = vmatprep.subr.mxu0 0.0
    %1220 = vmatpush1.msra.mxu0 0.0
    %1221 = vmatprep.subr.mxu0 0.0
    %1222 = vmatpush1.msra.mxu0 0.0
    %1223 = vmatprep.subr.mxu0 0.0
    %1224 = vmatpush1.msra.mxu0 0.0
    %1225 = vmatprep.subr.mxu0 0.0
    %1226 = vmatpush1.msra.mxu0 0.0
    %1227 = vmatprep.subr.mxu0 0.0
    %1228 = vmatpush1.msra.mxu0 0.0
    %1229 = vmatprep.subr.mxu0 0.0
    %1230 = vmatpush1.msra.mxu0 0.0
    %1231 = vmatprep.subr.mxu0 0.0
    %1232 = vmatpush1.msra.mxu0 0.0
    %1233 = vmatprep.subr.mxu0 0.0
    %1234 = vmatpush1.msra.mxu0 0.0
    %1235 = vmatprep.subr.mxu0 0.0
    %1236 = vmatpush1.msra.mxu0 0.0
    %1237 = vmatprep.subr.mxu0 0.0
    %1238 = vmatpush1.msra.mxu0 0.0
    %1239 = vmatprep.subr.mxu0 0.0
    %1240 = vmatpush1.msra.mxu0 0.0
    %1241 = vmatprep.subr.mxu0 0.0
    %1242 = vmatpush1.msra.mxu0 0.0
    %1243 = vmatprep.subr.mxu0 0.0
    %1244 = vmatpush1.msra.mxu0 0.0
    %1245 = vmatprep.subr.mxu0 0.0
    %1246 = vmatpush1.msra.mxu0 0.0
    %1247 = vmatprep.subr.mxu0 0.0
    %1248 = vmatpush1.msra.mxu0 0.0
    %1249 = vmatprep.mubr.f32.mxu0 0.0
    %1250 = vmatmul.mubr.f32.gmra.mrb[0].mxu0 %v1109
    %v1251 = vpop.f32.mrb[0].mxu0
    %v1252 = vadd.f32 0.0, %v1251
    %v1253 = vpop.f32.mrb[0].mxu0
    %1254 = vdwg.mxu0
    %v1255 = vadd.f32 %v1111, %v1181
    %v1256 = vadd.f32 %v1112, %v1183
    %v1257 = vxor.u32 %v1255, 2147483648
    %v1258 = vxor.u32 %v1256, 2147483648
    %v1259 = vmul.f32 %v1257, 1.442695
    %v1260 = vpow.pop %v1259
    %v1261 = vmul.f32 %v1258, 1.442695
    %v1262 = vpow.pop %v1261
    %v1263 = vadd.f32 %v1260, 1.0
    %v1264 = vadd.f32 %v1262, 1.0
    %v1265 = vrcp.pop %v1263
    %v1266 = vmul.f32 1.0, %v1265
    %v1267 = vrcp.pop %v1264
    %v1268 = vmul.f32 1.0, %v1267
    %v1269 = vadd.f32 %v1252, %v440
    %v1270 = vmul.f32 %v1266, %v1269
    %v1271 = vadd.f32 %v1113, %v1270
    %v1272 = vtanh.pop %v1271
    %v1273 = vsub.f32 1.0, %v1268
    %v1274 = vmul.f32 %v1273, %v1272
    %v1275 = vmul.f32 %v1268, %v1109
    %v1276 = vadd.f32 %v1274, %v1275
    %s1277 = scalar_lea.vmem [#allocation2], 120
    %v1278 = vld [vmem:[%s1277] sm:$0xff]
    %v1279 = vld [vmem:[%s1277 + $0x8] sm:$0xff]
    %v1280 = vld [vmem:[%s1277 + $0x10] sm:$0xff]
    %1281 = vmatprep.subr.mxu0 %v388
    %1282 = vmatpush1.msra.mxu0 %v387
    %1283 = vmatprep.subr.mxu0 %v391
    %1284 = vmatpush1.msra.mxu0 %v390
    %1285 = vmatprep.subr.mxu0 %v394
    %1286 = vmatpush1.msra.mxu0 %v393
    %1287 = vmatprep.subr.mxu0 %v397
    %1288 = vmatpush1.msra.mxu0 %v396
    %1289 = vmatprep.subr.mxu0 %v400
    %1290 = vmatpush1.msra.mxu0 %v399
    %1291 = vmatprep.subr.mxu0 %v403
    %1292 = vmatpush1.msra.mxu0 %v402
    %1293 = vmatprep.subr.mxu0 %v406
    %1294 = vmatpush1.msra.mxu0 %v405
    %1295 = vmatprep.subr.mxu0 %v409
    %1296 = vmatpush1.msra.mxu0 %v408
    %1297 = vmatprep.subr.mxu0 %v412
    %1298 = vmatpush1.msra.mxu0 %v411
    %1299 = vmatprep.subr.mxu0 %v415
    %1300 = vmatpush1.msra.mxu0 %v414
    %1301 = vmatprep.subr.mxu0 %v418
    %1302 = vmatpush1.msra.mxu0 %v417
    %1303 = vmatprep.subr.mxu0 %v421
    %1304 = vmatpush1.msra.mxu0 %v420
    %1305 = vmatprep.subr.mxu0 %v424
    %1306 = vmatpush1.msra.mxu0 %v423
    %1307 = vmatprep.subr.mxu0 %v427
    %1308 = vmatpush1.msra.mxu0 %v426
    %1309 = vmatprep.subr.mxu0 %v430
    %1310 = vmatpush1.msra.mxu0 %v429
    %1311 = vmatprep.subr.mxu0 %v433
    %1312 = vmatpush1.msra.mxu0 %v432
    %1313 = vmatprep.subr.mxu0 0.0
    %1314 = vmatpush1.msra.mxu0 0.0
    %1315 = vmatprep.subr.mxu0 0.0
    %1316 = vmatpush1.msra.mxu0 0.0
    %1317 = vmatprep.subr.mxu0 0.0
    %1318 = vmatpush1.msra.mxu0 0.0
    %1319 = vmatprep.subr.mxu0 0.0
    %1320 = vmatpush1.msra.mxu0 0.0
    %1321 = vmatprep.subr.mxu0 0.0
    %1322 = vmatpush1.msra.mxu0 0.0
    %1323 = vmatprep.subr.mxu0 0.0
    %1324 = vmatpush1.msra.mxu0 0.0
    %1325 = vmatprep.subr.mxu0 0.0
    %1326 = vmatpush1.msra.mxu0 0.0
    %1327 = vmatprep.subr.mxu0 0.0
    %1328 = vmatpush1.msra.mxu0 0.0
    %1329 = vmatprep.subr.mxu0 0.0
    %1330 = vmatpush1.msra.mxu0 0.0
    %1331 = vmatprep.subr.mxu0 0.0
    %1332 = vmatpush1.msra.mxu0 0.0
    %1333 = vmatprep.subr.mxu0 0.0
    %1334 = vmatpush1.msra.mxu0 0.0
    %1335 = vmatprep.subr.mxu0 0.0
    %1336 = vmatpush1.msra.mxu0 0.0
    %1337 = vmatprep.subr.mxu0 0.0
    %1338 = vmatpush1.msra.mxu0 0.0
    %1339 = vmatprep.subr.mxu0 0.0
    %1340 = vmatpush1.msra.mxu0 0.0
    %1341 = vmatprep.subr.mxu0 0.0
    %1342 = vmatpush1.msra.mxu0 0.0
    %1343 = vmatprep.subr.mxu0 0.0
    %1344 = vmatpush1.msra.mxu0 0.0
    %1345 = vmatprep.mubr.f32.mxu0 0.0
    %1346 = vmatmul.mubr.f32.gmra.mrb[0].mxu0 %v1276
    %v1347 = vpop.f32.mrb[0].mxu0
    %v1348 = vadd.f32 0.0, %v1347
    %v1349 = vpop.f32.mrb[0].mxu0
    %v1350 = vadd.f32 0.0, %v1349
    %1351 = vdwg.mxu0
    %1352 = vmatprep.subr.mxu0 0.0
    %1353 = vmatpush1.msra.mxu0 %v389
    %1354 = vmatprep.subr.mxu0 0.0
    %1355 = vmatpush1.msra.mxu0 %v392
    %1356 = vmatprep.subr.mxu0 0.0
    %1357 = vmatpush1.msra.mxu0 %v395
    %1358 = vmatprep.subr.mxu0 0.0
    %1359 = vmatpush1.msra.mxu0 %v398
    %1360 = vmatprep.subr.mxu0 0.0
    %1361 = vmatpush1.msra.mxu0 %v401
    %1362 = vmatprep.subr.mxu0 0.0
    %1363 = vmatpush1.msra.mxu0 %v404
    %1364 = vmatprep.subr.mxu0 0.0
    %1365 = vmatpush1.msra.mxu0 %v407
    %1366 = vmatprep.subr.mxu0 0.0
    %1367 = vmatpush1.msra.mxu0 %v410
    %1368 = vmatprep.subr.mxu0 0.0
    %1369 = vmatpush1.msra.mxu0 %v413
    %1370 = vmatprep.subr.mxu0 0.0
    %1371 = vmatpush1.msra.mxu0 %v416
    %1372 = vmatprep.subr.mxu0 0.0
    %1373 = vmatpush1.msra.mxu0 %v419
    %1374 = vmatprep.subr.mxu0 0.0
    %1375 = vmatpush1.msra.mxu0 %v422
    %1376 = vmatprep.subr.mxu0 0.0
    %1377 = vmatpush1.msra.mxu0 %v425
    %1378 = vmatprep.subr.mxu0 0.0
    %1379 = vmatpush1.msra.mxu0 %v428
    %1380 = vmatprep.subr.mxu0 0.0
    %1381 = vmatpush1.msra.mxu0 %v431
    %1382 = vmatprep.subr.mxu0 0.0
    %1383 = vmatpush1.msra.mxu0 %v434
    %1384 = vmatprep.subr.mxu0 0.0
    %1385 = vmatpush1.msra.mxu0 0.0
    %1386 = vmatprep.subr.mxu0 0.0
    %1387 = vmatpush1.msra.mxu0 0.0
    %1388 = vmatprep.subr.mxu0 0.0
    %1389 = vmatpush1.msra.mxu0 0.0
    %1390 = vmatprep.subr.mxu0 0.0
    %1391 = vmatpush1.msra.mxu0 0.0
    %1392 = vmatprep.subr.mxu0 0.0
    %1393 = vmatpush1.msra.mxu0 0.0
    %1394 = vmatprep.subr.mxu0 0.0
    %1395 = vmatpush1.msra.mxu0 0.0
    %1396 = vmatprep.subr.mxu0 0.0
    %1397 = vmatpush1.msra.mxu0 0.0
    %1398 = vmatprep.subr.mxu0 0.0
    %1399 = vmatpush1.msra.mxu0 0.0
    %1400 = vmatprep.subr.mxu0 0.0
    %1401 = vmatpush1.msra.mxu0 0.0
    %1402 = vmatprep.subr.mxu0 0.0
    %1403 = vmatpush1.msra.mxu0 0.0
    %1404 = vmatprep.subr.mxu0 0.0
    %1405 = vmatpush1.msra.mxu0 0.0
    %1406 = vmatprep.subr.mxu0 0.0
    %1407 = vmatpush1.msra.mxu0 0.0
    %1408 = vmatprep.subr.mxu0 0.0
    %1409 = vmatpush1.msra.mxu0 0.0
    %1410 = vmatprep.subr.mxu0 0.0
    %1411 = vmatpush1.msra.mxu0 0.0
    %1412 = vmatprep.subr.mxu0 0.0
    %1413 = vmatpush1.msra.mxu0 0.0
    %1414 = vmatprep.subr.mxu0 0.0
    %1415 = vmatpush1.msra.mxu0 0.0
    %1416 = vmatprep.mubr.f32.mxu0 0.0
    %1417 = vmatmul.mubr.f32.gmra.mrb[0].mxu0 %v1276
    %v1418 = vpop.f32.mrb[0].mxu0
    %v1419 = vadd.f32 0.0, %v1418
    %v1420 = vpop.f32.mrb[0].mxu0
    %1421 = vdwg.mxu0
    %v1422 = vadd.f32 %v1278, %v1348
    %v1423 = vadd.f32 %v1279, %v1350
    %v1424 = vxor.u32 %v1422, 2147483648
    %v1425 = vxor.u32 %v1423, 2147483648
    %v1426 = vmul.f32 %v1424, 1.442695
    %v1427 = vpow.pop %v1426
    %v1428 = vmul.f32 %v1425, 1.442695
    %v1429 = vpow.pop %v1428
    %v1430 = vadd.f32 %v1427, 1.0
    %v1431 = vadd.f32 %v1429, 1.0
    %v1432 = vrcp.pop %v1430
    %v1433 = vmul.f32 1.0, %v1432
    %v1434 = vrcp.pop %v1431
    %v1435 = vmul.f32 1.0, %v1434
    %v1436 = vadd.f32 %v1419, %v440
    %v1437 = vmul.f32 %v1433, %v1436
    %v1438 = vadd.f32 %v1280, %v1437
    %v1439 = vtanh.pop %v1438
    %v1440 = vsub.f32 1.0, %v1435
    %v1441 = vmul.f32 %v1440, %v1439
    %v1442 = vmul.f32 %v1435, %v1276
    %v1443 = vadd.f32 %v1441, %v1442
    %s1444 = scalar_lea.vmem [#allocation2], 144
    %v1445 = vld [vmem:[%s1444] sm:$0xff]
    %v1446 = vld [vmem:[%s1444 + $0x8] sm:$0xff]
    %v1447 = vld [vmem:[%s1444 + $0x10] sm:$0xff]
    %1448 = vmatprep.subr.mxu0 %v388
    %1449 = vmatpush1.msra.mxu0 %v387
    %1450 = vmatprep.subr.mxu0 %v391
    %1451 = vmatpush1.msra.mxu0 %v390
    %1452 = vmatprep.subr.mxu0 %v394
    %1453 = vmatpush1.msra.mxu0 %v393
    %1454 = vmatprep.subr.mxu0 %v397
    %1455 = vmatpush1.msra.mxu0 %v396
    %1456 = vmatprep.subr.mxu0 %v400
    %1457 = vmatpush1.msra.mxu0 %v399
    %1458 = vmatprep.subr.mxu0 %v403
    %1459 = vmatpush1.msra.mxu0 %v402
    %1460 = vmatprep.subr.mxu0 %v406
    %1461 = vmatpush1.msra.mxu0 %v405
    %1462 = vmatprep.subr.mxu0 %v409
    %1463 = vmatpush1.msra.mxu0 %v408
    %1464 = vmatprep.subr.mxu0 %v412
    %1465 = vmatpush1.msra.mxu0 %v411
    %1466 = vmatprep.subr.mxu0 %v415
    %1467 = vmatpush1.msra.mxu0 %v414
    %1468 = vmatprep.subr.mxu0 %v418
    %1469 = vmatpush1.msra.mxu0 %v417
    %1470 = vmatprep.subr.mxu0 %v421
    %1471 = vmatpush1.msra.mxu0 %v420
    %1472 = vmatprep.subr.mxu0 %v424
    %1473 = vmatpush1.msra.mxu0 %v423
    %1474 = vmatprep.subr.mxu0 %v427
    %1475 = vmatpush1.msra.mxu0 %v426
    %1476 = vmatprep.subr.mxu0 %v430
    %1477 = vmatpush1.msra.mxu0 %v429
    %1478 = vmatprep.subr.mxu0 %v433
    %1479 = vmatpush1.msra.mxu0 %v432
    %1480 = vmatprep.subr.mxu0 0.0
    %1481 = vmatpush1.msra.mxu0 0.0
    %1482 = vmatprep.subr.mxu0 0.0
    %1483 = vmatpush1.msra.mxu0 0.0
    %1484 = vmatprep.subr.mxu0 0.0
    %1485 = vmatpush1.msra.mxu0 0.0
    %1486 = vmatprep.subr.mxu0 0.0
    %1487 = vmatpush1.msra.mxu0 0.0
    %1488 = vmatprep.subr.mxu0 0.0
    %1489 = vmatpush1.msra.mxu0 0.0
    %1490 = vmatprep.subr.mxu0 0.0
    %1491 = vmatpush1.msra.mxu0 0.0
    %1492 = vmatprep.subr.mxu0 0.0
    %1493 = vmatpush1.msra.mxu0 0.0
    %1494 = vmatprep.subr.mxu0 0.0
    %1495 = vmatpush1.msra.mxu0 0.0
    %1496 = vmatprep.subr.mxu0 0.0
    %1497 = vmatpush1.msra.mxu0 0.0
    %1498 = vmatprep.subr.mxu0 0.0
    %1499 = vmatpush1.msra.mxu0 0.0
    %1500 = vmatprep.subr.mxu0 0.0
    %1501 = vmatpush1.msra.mxu0 0.0
    %1502 = vmatprep.subr.mxu0 0.0
    %1503 = vmatpush1.msra.mxu0 0.0
    %1504 = vmatprep.subr.mxu0 0.0
    %1505 = vmatpush1.msra.mxu0 0.0
    %1506 = vmatprep.subr.mxu0 0.0
    %1507 = vmatpush1.msra.mxu0 0.0
    %1508 = vmatprep.subr.mxu0 0.0
    %1509 = vmatpush1.msra.mxu0 0.0
    %1510 = vmatprep.subr.mxu0 0.0
    %1511 = vmatpush1.msra.mxu0 0.0
    %1512 = vmatprep.mubr.f32.mxu0 0.0
    %1513 = vmatmul.mubr.f32.gmra.mrb[0].mxu0 %v1443
    %v1514 = vpop.f32.mrb[0].mxu0
    %v1515 = vadd.f32 0.0, %v1514
    %v1516 = vpop.f32.mrb[0].mxu0
    %v1517 = vadd.f32 0.0, %v1516
    %1518 = vdwg.mxu0
    %1519 = vmatprep.subr.mxu0 0.0
    %1520 = vmatpush1.msra.mxu0 %v389
    %1521 = vmatprep.subr.mxu0 0.0
    %1522 = vmatpush1.msra.mxu0 %v392
    %1523 = vmatprep.subr.mxu0 0.0
    %1524 = vmatpush1.msra.mxu0 %v395
    %1525 = vmatprep.subr.mxu0 0.0
    %1526 = vmatpush1.msra.mxu0 %v398
    %1527 = vmatprep.subr.mxu0 0.0
    %1528 = vmatpush1.msra.mxu0 %v401
    %1529 = vmatprep.subr.mxu0 0.0
    %1530 = vmatpush1.msra.mxu0 %v404
    %1531 = vmatprep.subr.mxu0 0.0
    %1532 = vmatpush1.msra.mxu0 %v407
    %1533 = vmatprep.subr.mxu0 0.0
    %1534 = vmatpush1.msra.mxu0 %v410
    %1535 = vmatprep.subr.mxu0 0.0
    %1536 = vmatpush1.msra.mxu0 %v413
    %1537 = vmatprep.subr.mxu0 0.0
    %1538 = vmatpush1.msra.mxu0 %v416
    %1539 = vmatprep.subr.mxu0 0.0
    %1540 = vmatpush1.msra.mxu0 %v419
    %1541 = vmatprep.subr.mxu0 0.0
    %1542 = vmatpush1.msra.mxu0 %v422
    %1543 = vmatprep.subr.mxu0 0.0
    %1544 = vmatpush1.msra.mxu0 %v425
    %1545 = vmatprep.subr.mxu0 0.0
    %1546 = vmatpush1.msra.mxu0 %v428
    %1547 = vmatprep.subr.mxu0 0.0
    %1548 = vmatpush1.msra.mxu0 %v431
    %1549 = vmatprep.subr.mxu0 0.0
    %1550 = vmatpush1.msra.mxu0 %v434
    %1551 = vmatprep.subr.mxu0 0.0
    %1552 = vmatpush1.msra.mxu0 0.0
    %1553 = vmatprep.subr.mxu0 0.0
    %1554 = vmatpush1.msra.mxu0 0.0
    %1555 = vmatprep.subr.mxu0 0.0
    %1556 = vmatpush1.msra.mxu0 0.0
    %1557 = vmatprep.subr.mxu0 0.0
    %1558 = vmatpush1.msra.mxu0 0.0
    %1559 = vmatprep.subr.mxu0 0.0
    %1560 = vmatpush1.msra.mxu0 0.0
    %1561 = vmatprep.subr.mxu0 0.0
    %1562 = vmatpush1.msra.mxu0 0.0
    %1563 = vmatprep.subr.mxu0 0.0
    %1564 = vmatpush1.msra.mxu0 0.0
    %1565 = vmatprep.subr.mxu0 0.0
    %1566 = vmatpush1.msra.mxu0 0.0
    %1567 = vmatprep.subr.mxu0 0.0
    %1568 = vmatpush1.msra.mxu0 0.0
    %1569 = vmatprep.subr.mxu0 0.0
    %1570 = vmatpush1.msra.mxu0 0.0
    %1571 = vmatprep.subr.mxu0 0.0
    %1572 = vmatpush1.msra.mxu0 0.0
    %1573 = vmatprep.subr.mxu0 0.0
    %1574 = vmatpush1.msra.mxu0 0.0
    %1575 = vmatprep.subr.mxu0 0.0
    %1576 = vmatpush1.msra.mxu0 0.0
    %1577 = vmatprep.subr.mxu0 0.0
    %1578 = vmatpush1.msra.mxu0 0.0
    %1579 = vmatprep.subr.mxu0 0.0
    %1580 = vmatpush1.msra.mxu0 0.0
    %1581 = vmatprep.subr.mxu0 0.0
    %1582 = vmatpush1.msra.mxu0 0.0
    %1583 = vmatprep.mubr.f32.mxu0 0.0
    %1584 = vmatmul.mubr.f32.gmra.mrb[0].mxu0 %v1443
    %v1585 = vpop.f32.mrb[0].mxu0
    %v1586 = vadd.f32 0.0, %v1585
    %v1587 = vpop.f32.mrb[0].mxu0
    %1588 = vdwg.mxu0
    %v1589 = vadd.f32 %v1445, %v1515
    %v1590 = vadd.f32 %v1446, %v1517
    %v1591 = vxor.u32 %v1589, 2147483648
    %v1592 = vxor.u32 %v1590, 2147483648
    %v1593 = vmul.f32 %v1591, 1.442695
    %v1594 = vpow.pop %v1593
    %v1595 = vmul.f32 %v1592, 1.442695
    %v1596 = vpow.pop %v1595
    %v1597 = vadd.f32 %v1594, 1.0
    %v1598 = vadd.f32 %v1596, 1.0
    %v1599 = vrcp.pop %v1597
    %v1600 = vmul.f32 1.0, %v1599
    %v1601 = vrcp.pop %v1598
    %v1602 = vmul.f32 1.0, %v1601
    %v1603 = vadd.f32 %v1586, %v440
    %v1604 = vmul.f32 %v1600, %v1603
    %v1605 = vadd.f32 %v1447, %v1604
    %v1606 = vtanh.pop %v1605
    %v1607 = vsub.f32 1.0, %v1602
    %v1608 = vmul.f32 %v1607, %v1606
    %v1609 = vmul.f32 %v1602, %v1443
    %v1610 = vadd.f32 %v1608, %v1609
    %s1611 = scalar_lea.vmem [#allocation2], 168
    %v1612 = vld [vmem:[%s1611] sm:$0xff]
    %v1613 = vld [vmem:[%s1611 + $0x8] sm:$0xff]
    %v1614 = vld [vmem:[%s1611 + $0x10] sm:$0xff]
    %1615 = vmatprep.subr.mxu0 %v388
    %1616 = vmatpush1.msra.mxu0 %v387
    %1617 = vmatprep.subr.mxu0 %v391
    %1618 = vmatpush1.msra.mxu0 %v390
    %1619 = vmatprep.subr.mxu0 %v394
    %1620 = vmatpush1.msra.mxu0 %v393
    %1621 = vmatprep.subr.mxu0 %v397
    %1622 = vmatpush1.msra.mxu0 %v396
    %1623 = vmatprep.subr.mxu0 %v400
    %1624 = vmatpush1.msra.mxu0 %v399
    %1625 = vmatprep.subr.mxu0 %v403
    %1626 = vmatpush1.msra.mxu0 %v402
    %1627 = vmatprep.subr.mxu0 %v406
    %1628 = vmatpush1.msra.mxu0 %v405
    %1629 = vmatprep.subr.mxu0 %v409
    %1630 = vmatpush1.msra.mxu0 %v408
    %1631 = vmatprep.subr.mxu0 %v412
    %1632 = vmatpush1.msra.mxu0 %v411
    %1633 = vmatprep.subr.mxu0 %v415
    %1634 = vmatpush1.msra.mxu0 %v414
    %1635 = vmatprep.subr.mxu0 %v418
    %1636 = vmatpush1.msra.mxu0 %v417
    %1637 = vmatprep.subr.mxu0 %v421
    %1638 = vmatpush1.msra.mxu0 %v420
    %1639 = vmatprep.subr.mxu0 %v424
    %1640 = vmatpush1.msra.mxu0 %v423
    %1641 = vmatprep.subr.mxu0 %v427
    %1642 = vmatpush1.msra.mxu0 %v426
    %1643 = vmatprep.subr.mxu0 %v430
    %1644 = vmatpush1.msra.mxu0 %v429
    %1645 = vmatprep.subr.mxu0 %v433
    %1646 = vmatpush1.msra.mxu0 %v432
    %1647 = vmatprep.subr.mxu0 0.0
    %1648 = vmatpush1.msra.mxu0 0.0
    %1649 = vmatprep.subr.mxu0 0.0
    %1650 = vmatpush1.msra.mxu0 0.0
    %1651 = vmatprep.subr.mxu0 0.0
    %1652 = vmatpush1.msra.mxu0 0.0
    %1653 = vmatprep.subr.mxu0 0.0
    %1654 = vmatpush1.msra.mxu0 0.0
    %1655 = vmatprep.subr.mxu0 0.0
    %1656 = vmatpush1.msra.mxu0 0.0
    %1657 = vmatprep.subr.mxu0 0.0
    %1658 = vmatpush1.msra.mxu0 0.0
    %1659 = vmatprep.subr.mxu0 0.0
    %1660 = vmatpush1.msra.mxu0 0.0
    %1661 = vmatprep.subr.mxu0 0.0
    %1662 = vmatpush1.msra.mxu0 0.0
    %1663 = vmatprep.subr.mxu0 0.0
    %1664 = vmatpush1.msra.mxu0 0.0
    %1665 = vmatprep.subr.mxu0 0.0
    %1666 = vmatpush1.msra.mxu0 0.0
    %1667 = vmatprep.subr.mxu0 0.0
    %1668 = vmatpush1.msra.mxu0 0.0
    %1669 = vmatprep.subr.mxu0 0.0
    %1670 = vmatpush1.msra.mxu0 0.0
    %1671 = vmatprep.subr.mxu0 0.0
    %1672 = vmatpush1.msra.mxu0 0.0
    %1673 = vmatprep.subr.mxu0 0.0
    %1674 = vmatpush1.msra.mxu0 0.0
    %1675 = vmatprep.subr.mxu0 0.0
    %1676 = vmatpush1.msra.mxu0 0.0
    %1677 = vmatprep.subr.mxu0 0.0
    %1678 = vmatpush1.msra.mxu0 0.0
    %1679 = vmatprep.mubr.f32.mxu0 0.0
    %1680 = vmatmul.mubr.f32.gmra.mrb[0].mxu0 %v1610
    %v1681 = vpop.f32.mrb[0].mxu0
    %v1682 = vadd.f32 0.0, %v1681
    %v1683 = vpop.f32.mrb[0].mxu0
    %v1684 = vadd.f32 0.0, %v1683
    %1685 = vdwg.mxu0
    %1686 = vmatprep.subr.mxu0 0.0
    %1687 = vmatpush1.msra.mxu0 %v389
    %1688 = vmatprep.subr.mxu0 0.0
    %1689 = vmatpush1.msra.mxu0 %v392
    %1690 = vmatprep.subr.mxu0 0.0
    %1691 = vmatpush1.msra.mxu0 %v395
    %1692 = vmatprep.subr.mxu0 0.0
    %1693 = vmatpush1.msra.mxu0 %v398
    %1694 = vmatprep.subr.mxu0 0.0
    %1695 = vmatpush1.msra.mxu0 %v401
    %1696 = vmatprep.subr.mxu0 0.0
    %1697 = vmatpush1.msra.mxu0 %v404
    %1698 = vmatprep.subr.mxu0 0.0
    %1699 = vmatpush1.msra.mxu0 %v407
    %1700 = vmatprep.subr.mxu0 0.0
    %1701 = vmatpush1.msra.mxu0 %v410
    %1702 = vmatprep.subr.mxu0 0.0
    %1703 = vmatpush1.msra.mxu0 %v413
    %1704 = vmatprep.subr.mxu0 0.0
    %1705 = vmatpush1.msra.mxu0 %v416
    %1706 = vmatprep.subr.mxu0 0.0
    %1707 = vmatpush1.msra.mxu0 %v419
    %1708 = vmatprep.subr.mxu0 0.0
    %1709 = vmatpush1.msra.mxu0 %v422
    %1710 = vmatprep.subr.mxu0 0.0
    %1711 = vmatpush1.msra.mxu0 %v425
    %1712 = vmatprep.subr.mxu0 0.0
    %1713 = vmatpush1.msra.mxu0 %v428
    %1714 = vmatprep.subr.mxu0 0.0
    %1715 = vmatpush1.msra.mxu0 %v431
    %1716 = vmatprep.subr.mxu0 0.0
    %1717 = vmatpush1.msra.mxu0 %v434
    %1718 = vmatprep.subr.mxu0 0.0
    %1719 = vmatpush1.msra.mxu0 0.0
    %1720 = vmatprep.subr.mxu0 0.0
    %1721 = vmatpush1.msra.mxu0 0.0
    %1722 = vmatprep.subr.mxu0 0.0
    %1723 = vmatpush1.msra.mxu0 0.0
    %1724 = vmatprep.subr.mxu0 0.0
    %1725 = vmatpush1.msra.mxu0 0.0
    %1726 = vmatprep.subr.mxu0 0.0
    %1727 = vmatpush1.msra.mxu0 0.0
    %1728 = vmatprep.subr.mxu0 0.0
    %1729 = vmatpush1.msra.mxu0 0.0
    %1730 = vmatprep.subr.mxu0 0.0
    %1731 = vmatpush1.msra.mxu0 0.0
    %1732 = vmatprep.subr.mxu0 0.0
    %1733 = vmatpush1.msra.mxu0 0.0
    %1734 = vmatprep.subr.mxu0 0.0
    %1735 = vmatpush1.msra.mxu0 0.0
    %1736 = vmatprep.subr.mxu0 0.0
    %1737 = vmatpush1.msra.mxu0 0.0
    %1738 = vmatprep.subr.mxu0 0.0
    %1739 = vmatpush1.msra.mxu0 0.0
    %1740 = vmatprep.subr.mxu0 0.0
    %1741 = vmatpush1.msra.mxu0 0.0
    %1742 = vmatprep.subr.mxu0 0.0
    %1743 = vmatpush1.msra.mxu0 0.0
    %1744 = vmatprep.subr.mxu0 0.0
    %1745 = vmatpush1.msra.mxu0 0.0
    %1746 = vmatprep.subr.mxu0 0.0
    %1747 = vmatpush1.msra.mxu0 0.0
    %1748 = vmatprep.subr.mxu0 0.0
    %1749 = vmatpush1.msra.mxu0 0.0
    %1750 = vmatprep.mubr.f32.mxu0 0.0
    %1751 = vmatmul.mubr.f32.gmra.mrb[0].mxu0 %v1610
    %v1752 = vpop.f32.mrb[0].mxu0
    %v1753 = vadd.f32 0.0, %v1752
    %v1754 = vpop.f32.mrb[0].mxu0
    %1755 = vdwg.mxu0
    %v1756 = vadd.f32 %v1612, %v1682
    %v1757 = vadd.f32 %v1613, %v1684
    %v1758 = vxor.u32 %v1756, 2147483648
    %v1759 = vxor.u32 %v1757, 2147483648
    %v1760 = vmul.f32 %v1758, 1.442695
    %v1761 = vpow.pop %v1760
    %v1762 = vmul.f32 %v1759, 1.442695
    %v1763 = vpow.pop %v1762
    %v1764 = vadd.f32 %v1761, 1.0
    %v1765 = vadd.f32 %v1763, 1.0
    %v1766 = vrcp.pop %v1764
    %v1767 = vmul.f32 1.0, %v1766
    %v1768 = vrcp.pop %v1765
    %v1769 = vmul.f32 1.0, %v1768
    %v1770 = vadd.f32 %v1753, %v440
    %v1771 = vmul.f32 %v1767, %v1770
    %v1772 = vadd.f32 %v1614, %v1771
    %v1773 = vtanh.pop %v1772
    %v1774 = vsub.f32 1.0, %v1769
    %v1775 = vmul.f32 %v1774, %v1773
    %v1776 = vmul.f32 %v1769, %v1610
    %v1777 = vadd.f32 %v1775, %v1776
    %1778 = vst [vmem:[#allocation3] sm:$0xff] %v1777
    // Predicated region
    $region46: #{gru_model_forward.1} parent=1 // pred_check
      %p1779 = pneg %p67
    $region47: #{gru_model_forward.1} parent=1 // pred_check_branch
      %1781 = sbr.rel (%p1779) target = $region49
    $region48: #{gru_model_forward.1} parent=1 // pred_region
      %v1782 = vld [vmem:[#allocation8] sm:$0xff]
      %v1783 = vld [vmem:[#allocation8 + $0x8] sm:$0xff]
      %v1784 = vld [vmem:[#allocation8 + $0x10] sm:$0xff]
      %v1785 = vld [vmem:[#allocation8 + $0x18] sm:$0xff]
      %v1786 = vld [vmem:[#allocation8 + $0x20] sm:$0xff]
      %v1787 = vld [vmem:[#allocation8 + $0x28] sm:$0xff]
      %v1788 = vld [vmem:[#allocation8 + $0x30] sm:$0xff]
      %v1789 = vld [vmem:[#allocation8 + $0x38] sm:$0xff]
      %v1790 = vld [vmem:[#allocation8 + $0x40] sm:$0xff]
      %v1791 = vld [vmem:[#allocation8 + $0x48] sm:$0xff]
      %v1792 = vld [vmem:[#allocation8 + $0x50] sm:$0xff]
      %v1793 = vld [vmem:[#allocation8 + $0x58] sm:$0xff]
      %v1794 = vld [vmem:[#allocation8 + $0x60] sm:$0xff]
      %v1795 = vld [vmem:[#allocation8 + $0x68] sm:$0xff]
      %v1796 = vld [vmem:[#allocation8 + $0x70] sm:$0xff]
      %v1797 = vld [vmem:[#allocation8 + $0x78] sm:$0xff]
      %v1798 = vld [vmem:[%s6] sm:$0x1]
      %v1800 = vlaneseq
      %v1801 = vshrl.u32 %v1800, 7
      %v1802 = vsub.s32 0, %v1801
      %v1803 = vrot.slane %v1798, %v1802
      %1805 = vmatprep.subr.mxu0 0.0
      %1806 = vmatpush1.msra.mxu0 %v1782
      %1807 = vmatprep.subr.mxu0 0.0
      %1808 = vmatpush1.msra.mxu0 %v1783
      %1809 = vmatprep.subr.mxu0 0.0
      %1810 = vmatpush1.msra.mxu0 %v1784
      %1811 = vmatprep.subr.mxu0 0.0
      %1812 = vmatpush1.msra.mxu0 %v1785
      %1813 = vmatprep.subr.mxu0 0.0
      %1814 = vmatpush1.msra.mxu0 %v1786
      %1815 = vmatprep.subr.mxu0 0.0
      %1816 = vmatpush1.msra.mxu0 %v1787
      %1817 = vmatprep.subr.mxu0 0.0
      %1818 = vmatpush1.msra.mxu0 %v1788
      %1819 = vmatprep.subr.mxu0 0.0
      %1820 = vmatpush1.msra.mxu0 %v1789
      %1821 = vmatprep.subr.mxu0 0.0
      %1822 = vmatpush1.msra.mxu0 %v1790
      %1823 = vmatprep.subr.mxu0 0.0
      %1824 = vmatpush1.msra.mxu0 %v1791
      %1825 = vmatprep.subr.mxu0 0.0
      %1826 = vmatpush1.msra.mxu0 %v1792
      %1827 = vmatprep.subr.mxu0 0.0
      %1828 = vmatpush1.msra.mxu0 %v1793
      %1829 = vmatprep.subr.mxu0 0.0
      %1830 = vmatpush1.msra.mxu0 %v1794
      %1831 = vmatprep.subr.mxu0 0.0
      %1832 = vmatpush1.msra.mxu0 %v1795
      %1833 = vmatprep.subr.mxu0 0.0
      %1834 = vmatpush1.msra.mxu0 %v1796
      %1835 = vmatprep.subr.mxu0 0.0
      %1836 = vmatpush1.msra.mxu0 %v1797
      %1837 = vmatprep.subr.mxu0 0.0
      %1838 = vmatpush1.msra.mxu0 0.0
      %1839 = vmatprep.subr.mxu0 0.0
      %1840 = vmatpush1.msra.mxu0 0.0
      %1841 = vmatprep.subr.mxu0 0.0
      %1842 = vmatpush1.msra.mxu0 0.0
      %1843 = vmatprep.subr.mxu0 0.0
      %1844 = vmatpush1.msra.mxu0 0.0
      %1845 = vmatprep.subr.mxu0 0.0
      %1846 = vmatpush1.msra.mxu0 0.0
      %1847 = vmatprep.subr.mxu0 0.0
      %1848 = vmatpush1.msra.mxu0 0.0
      %1849 = vmatprep.subr.mxu0 0.0
      %1850 = vmatpush1.msra.mxu0 0.0
      %1851 = vmatprep.subr.mxu0 0.0
      %1852 = vmatpush1.msra.mxu0 0.0
      %1853 = vmatprep.subr.mxu0 0.0
      %1854 = vmatpush1.msra.mxu0 0.0
      %1855 = vmatprep.subr.mxu0 0.0
      %1856 = vmatpush1.msra.mxu0 0.0
      %1857 = vmatprep.subr.mxu0 0.0
      %1858 = vmatpush1.msra.mxu0 0.0
      %1859 = vmatprep.subr.mxu0 0.0
      %1860 = vmatpush1.msra.mxu0 0.0
      %1861 = vmatprep.subr.mxu0 0.0
      %1862 = vmatpush1.msra.mxu0 0.0
      %1863 = vmatprep.subr.mxu0 0.0
      %1864 = vmatpush1.msra.mxu0 0.0
      %1865 = vmatprep.subr.mxu0 0.0
      %1866 = vmatpush1.msra.mxu0 0.0
      %1867 = vmatprep.subr.mxu0 0.0
      %1868 = vmatpush1.msra.mxu0 0.0
      %1869 = vmatprep.mubr.f32.mxu0 0.0
      %1870 = vmatmul.mubr.f32.gmra.mrb[0].mxu0 %v1777
      %v1871 = vpop.f32.mrb[0].mxu0
      %v1872 = vadd.f32 %v1803, %v1871
      %v1873 = vpop.f32.mrb[0].mxu0
      %1874 = vdwg.mxu0
      %1875 = vst [vmem:[%s7] sm:$0xff] %v1872
    $region49: #{gru_model_forward.1} parent=1 // pred_fallthru
      _
    // Predicated region
    $region50: #{gru_model_forward.1} parent=1 // pred_check
      _
    $region51: #{gru_model_forward.1} parent=1 // pred_check_branch
      %1877 = sbr.rel (0) target = $region53
    $region52: #{gru_model_forward.1} parent=1 // pred_region
      _
    $region53: #{gru_model_forward.1} parent=1 // pred_fallthru
      _
    // Predicated region
    $region54: #{gru_model_forward.1} parent=1 // pred_check
      _
    $region55: #{gru_model_forward.1} parent=1 // pred_check_branch
      %1879 = sbr.rel (0) target = $region57
    $region56: #{gru_model_forward.1} parent=1 // pred_region
      _
    $region57: #{gru_model_forward.1} parent=1 // pred_fallthru
      _
    %1880 = vsyncpa [#allocation5], 1
    %1881 = vsyncpa [#allocation7], 1

</llo_original>
